<compile_context>
chip_gen: v7x
topology: tpu7x:2x2x1
jax: 0.10.0
libtpu: 0.0.40
codegen_flags: <defaults>
</compile_context>

<pallas_src>
import jax
import jax.numpy as jnp
from jax.experimental import pallas as pl
from jax.experimental.pallas import tpu as pltpu

# ---- synthetic config ----
HIDDEN = 32
EMB = 32
VOCAB = 128
T_K = 8
BATCH = 2
N_EXTRA = 8          # size of extra_zeros (extended OOV vocab)

# ---- packed weight-buffer layout (row offsets into WB, all multiples of 8) ----
R_WXC_C = 0                        # (4H, E)  c_t_1   -> x
R_WXC_E = R_WXC_C + 4 * HIDDEN     # (E, E)   y_emb   -> x
R_WIH   = R_WXC_E + EMB            # (E, 4H)  x       -> lstm gates
R_WHH   = R_WIH + EMB              # (H, 4H)  h_{t-1} -> lstm gates
R_WDP_H = R_WHH + HIDDEN           # (H, 2H)  h_t     -> dec_fea
R_WDP_C = R_WDP_H + HIDDEN         # (H, 2H)  c_t     -> dec_fea
R_W1_H  = R_WDP_C + HIDDEN         # (H, H)   h_t     -> out1
R_W1_CT = R_W1_H + HIDDEN          # (4H, H)  context -> out1
R_W2    = R_W1_CT + 4 * HIDDEN     # (H, V)   out1    -> logits
WB_ROWS = R_W2 + HIDDEN            # 480

# VB rows (each lane-padded to 128):
#  0 bxc, 1 b_lstm(=bih+bhh), 2 bdp, 3 b1, 4 b2, 5 wv,
#  6 wpg[context 4H], 7 wpg[h], 8 wpg[c], 9 wpg[x], 10 bpg
VB_ROWS = 16

# ACT packed activations: [c_t_1 | y_emb | h_{t-1} | c_{t-1} | pad]
A_CTX1 = 0
A_EMB = A_CTX1 + 4 * HIDDEN
A_H0 = A_EMB + EMB
A_C0 = A_H0 + HIDDEN
ACT_W = 256

V_PAD = 256          # lane-padded extended vocab (>= VOCAB + N_EXTRA, multiple of 128)


def decoder_kernel(act_ref, enc_out_ref, enc_feat_ref, mask_ref, ids_ref,
                   wb_ref, vb_ref, out_ref):
    f32 = jnp.float32
    H = HIDDEN
    B = act_ref.shape[0]
    two_h = enc_out_ref.shape[2]
    T = mask_ref.shape[1]

    # ---- unpack per-step activations (single DMA'd buffer) ----
    act = act_ref[...]
    c_t_1 = act[:, A_CTX1:A_CTX1 + 4 * H]            # (B, 4H)
    y_emb = act[:, A_EMB:A_EMB + EMB]                # (B, E)
    h0 = act[:, A_H0:A_H0 + H]                       # (B, H)
    c0 = act[:, A_C0:A_C0 + H]                       # (B, H)

    # ---- unpack bias / row-vector buffer ----
    vb = vb_ref[...]                                 # (16, 128)
    bxc, b_lstm, bdp, b1, b2 = vb[0:1, :], vb[1:2, :], vb[2:3, :], vb[3:4, :], vb[4:5, :]
    wv = vb[5:6, 0:two_h]                            # (1, 2H)
    wpg_ct = vb[6:7, :]                              # (1, 4H)
    wpg_h = vb[7:8, 0:H]
    wpg_c = vb[8:9, 0:H]
    wpg_x = vb[9:10, 0:EMB]
    bpg = vb[10:11, 0:1]

    # ---- x = x_context([c_t_1 ; y_emb])  (concat removed: split weights) ----
    x = (jnp.dot(c_t_1, wb_ref[R_WXC_C:R_WXC_C + 4 * H, :], preferred_element_type=f32)
         + jnp.dot(y_emb, wb_ref[R_WXC_E:R_WXC_E + EMB, :], preferred_element_type=f32)
         + bxc)                                      # (B, 128); lanes >= EMB are exactly 0
    x32 = x[:, 0:EMB]

    # ---- single-step LSTM cell (PyTorch gate order i, f, g, o) ----
    gates = (jnp.dot(x32, wb_ref[R_WIH:R_WIH + EMB, :], preferred_element_type=f32)
             + jnp.dot(h0, wb_ref[R_WHH:R_WHH + H, :], preferred_element_type=f32)
             + b_lstm)                               # (B, 4H)
    i_g = jax.nn.sigmoid(gates[:, 0:H])
    f_g = jax.nn.sigmoid(gates[:, H:2 * H])
    g_g = jnp.tanh(gates[:, 2 * H:3 * H])
    o_g = jax.nn.sigmoid(gates[:, 3 * H:4 * H])
    c_new = f_g * c0 + i_g * g_g
    h_new = o_g * jnp.tanh(c_new)

    # ---- fused dual attention (graph & ast stacked on leading axis, shared weights) ----
    dec_fea = (jnp.dot(h_new, wb_ref[R_WDP_H:R_WDP_H + H, :], preferred_element_type=f32)
               + jnp.dot(c_new, wb_ref[R_WDP_C:R_WDP_C + H, :], preferred_element_type=f32)
               + bdp)[:, 0:two_h]                    # computed once, shared by both passes
    dec2 = jnp.concatenate([dec_fea, dec_fea], axis=0)    # (2B, 2H)
    mask = mask_ref[...]
    mask2 = jnp.concatenate([mask, mask], axis=0)         # (2B, T)

    e = jnp.tanh(enc_feat_ref[...] + dec2[:, None, :])    # (2B, T, 2H)
    scores = jnp.sum(e * wv[None], axis=-1)               # VPU mult + lane reduce (no 1-col matmul)
    scores = scores + (mask2 - 1.0) * 1e9                 # additive mask == softmax*mask + renorm
    m = jnp.max(scores, axis=1, keepdims=True)
    pexp = jnp.exp(scores - m)
    attn = pexp * pl.reciprocal(jnp.sum(pexp, axis=1, keepdims=True), approx=True)
    ctx = jnp.sum(attn[:, :, None] * enc_out_ref[...], axis=1)     # (2B, 2H)

    c_t = jnp.concatenate([ctx[0:B], ctx[B:2 * B]], axis=1)        # (B, 4H) context
    attn_sum = attn[0:B] + attn[B:2 * B]
    attn_dist = attn_sum / jnp.sum(attn_sum, axis=1, keepdims=True)  # exact renorm

    # ---- p_gen (1-column matmul -> broadcast-mult + lane reduce) ----
    pg_logit = (jnp.sum(c_t * wpg_ct, axis=1, keepdims=True)
                + jnp.sum(h_new * wpg_h, axis=1, keepdims=True)
                + jnp.sum(c_new * wpg_c, axis=1, keepdims=True)
                + jnp.sum(x32 * wpg_x, axis=1, keepdims=True)
                + bpg)
    p_gen = jax.nn.sigmoid(pg_logit)                               # (B, 1)

    # ---- vocab distribution ----
    out1 = jnp.tanh(jnp.dot(h_new, wb_ref[R_W1_H:R_W1_H + H, :], preferred_element_type=f32)
                    + jnp.dot(c_t, wb_ref[R_W1_CT:R_W1_CT + 4 * H, :], preferred_element_type=f32)
                    + b1)
    logits = jnp.dot(out1[:, 0:H], wb_ref[R_W2:R_W2 + H, :], preferred_element_type=f32) + b2
    lm = jnp.max(logits, axis=1, keepdims=True)
    lp = jnp.exp(logits - lm)
    vocab_dist = lp / jnp.sum(lp, axis=1, keepdims=True)           # (B, V)

    # ---- pointer mixing + scatter_add over the 128-lane-padded extended vocab ----
    vocab_dist_ = p_gen * vocab_dist                               # (B, V)
    attn_dist_ = (1.0 - p_gen) * attn_dist                         # (B, T)
    ids = ids_ref[...]                                             # (B, T) int32
    iota = jax.lax.broadcasted_iota(jnp.int32, (B, T, V_PAD), 2)
    onehot = (ids[:, :, None] == iota).astype(f32)                 # (B, T, V_PAD)
    scat = jnp.sum(attn_dist_[:, :, None] * onehot, axis=1)        # (B, V_PAD)
    final_pad = jnp.concatenate(
        [vocab_dist_, jnp.zeros((B, V_PAD - VOCAB), f32)], axis=1) + scat

    # ---- single lane-dense packed output slab -> one unmasked store / one writeback DMA ----
    pad_w = out_ref.shape[1] - (V_PAD + 6 * H + T + 1)
    out_ref[...] = jnp.concatenate(
        [final_pad, h_new, c_new, c_t, attn_dist, p_gen,
         jnp.zeros((B, pad_w), f32)], axis=1)


def pack_params(p):
    """One-time packing of all decoder weights into two lane-aligned buffers."""
    f32 = jnp.float32

    def padl(w):           # pad output (lane) dim to 128
        return jnp.pad(w, ((0, 0), (0, 128 - w.shape[1])))

    def row(v):            # one (1, 128) row, zero-padded
        v = jnp.asarray(v, f32).reshape(1, -1)
        return jnp.pad(v, ((0, 0), (0, 128 - v.shape[1])))

    wxc, wdp, w1 = p['wxc'], p['wdp'], p['w1']
    wb = jnp.concatenate([
        padl(wxc[:4 * HIDDEN]),      # R_WXC_C : c_t_1 part of x_context
        padl(wxc[4 * HIDDEN:]),      # R_WXC_E : embedding part of x_context
        p['wih'],                    # R_WIH
        p['whh'],                    # R_WHH
        padl(wdp[:HIDDEN]),          # R_WDP_H : h part of decode_proj
        padl(wdp[HIDDEN:]),          # R_WDP_C : c part of decode_proj
        padl(w1[:HIDDEN]),           # R_W1_H  : lstm_out part of out1
        padl(w1[HIDDEN:]),           # R_W1_CT : context part of out1
        p['w2'],                     # R_W2
    ], axis=0).astype(f32)
    assert wb.shape == (WB_ROWS, 128)

    wpg = p['wpg'].reshape(-1)       # (6H+E,) in [c_t | h | c | x] order
    vb = jnp.concatenate([
        row(p['bxc']),                           # 0
        row(p['bih'] + p['bhh']),                # 1
        row(p['bdp']),                           # 2
        row(p['b1']),                            # 3
        row(p['b2']),                            # 4
        row(p['wv'].reshape(1, -1)),             # 5
        row(wpg[:4 * HIDDEN]),                   # 6
        row(wpg[4 * HIDDEN:5 * HIDDEN]),         # 7
        row(wpg[5 * HIDDEN:6 * HIDDEN]),         # 8
        row(wpg[6 * HIDDEN:]),                   # 9
        row(p['bpg']),                           # 10
        jnp.zeros((VB_ROWS - 11, 128), f32),
    ], axis=0).astype(f32)
    assert vb.shape == (VB_ROWS, 128)

    return {'embedding': p['embedding'], 'wb': wb, 'vb': vb}


def decoder_forward(packed, y_t_1, s_t_1, graph_enc_outputs, ast_encoder_outputs,
                    graph_encoder_feature, ast_encoder_feature, enc_padding_mask,
                    c_t_1, extra_zeros, enc_batch_extend_vocab, coverage, step):
    h0, c0 = s_t_1                                   # (1, B, H) each
    B = y_t_1.shape[0]
    T = graph_enc_outputs.shape[1]
    n_extra = 0 if extra_zeros is None else extra_zeros.shape[1]
    v_ext = VOCAB + n_extra
    assert v_ext <= V_PAD

    # glue: embedding lookup (gather stays outside the kernel)
    y_emb = jnp.take(packed['embedding'], y_t_1, axis=0).astype(jnp.float32)

    # one packed activation buffer -> single input DMA
    act = jnp.concatenate(
        [c_t_1, y_emb, h0.reshape(B, HIDDEN), c0.reshape(B, HIDDEN),
         jnp.zeros((B, ACT_W - (4 * HIDDEN + EMB + 2 * HIDDEN)), jnp.float32)], axis=1)

    # stack graph/ast encoder tensors on the leading axis -> one fused attention pass
    enc_out = jnp.concatenate([graph_enc_outputs, ast_encoder_outputs], axis=0)
    enc_feat = jnp.concatenate([graph_encoder_feature.reshape(B, T, -1),
                                ast_encoder_feature.reshape(B, T, -1)], axis=0)

    out_w = -(-(V_PAD + 6 * HIDDEN + T + 1) // 128) * 128       # lane-dense output slab width
    vmem = pl.BlockSpec(memory_space=pltpu.MemorySpace.VMEM)
    out = pl.pallas_call(
        decoder_kernel,
        out_shape=jax.ShapeDtypeStruct((B, out_w), jnp.float32),
        in_specs=[vmem] * 7,
        out_specs=vmem,
    )(act, enc_out, enc_feat, enc_padding_mask.astype(jnp.float32),
      enc_batch_extend_vocab.astype(jnp.int32), packed['wb'], packed['vb'])

    # unpack the output slab
    off_h = V_PAD
    off_c = off_h + HIDDEN
    off_ct = off_c + HIDDEN
    off_at = off_ct + 4 * HIDDEN
    off_pg = off_at + T
    final_dist = out[:, :v_ext]
    s_t = (out[:, off_h:off_c].reshape(1, B, HIDDEN),
           out[:, off_c:off_ct].reshape(1, B, HIDDEN))
    c_ctx = out[:, off_ct:off_at]
    attn_dist = out[:, off_at:off_pg]
    p_gen = out[:, off_pg:off_pg + 1]
    return final_dist, s_t, c_ctx, attn_dist, p_gen, coverage


def init_params(key):
    ks = jax.random.split(key, 12)

    def xavier(k, shape):
        std = (2.0 / (shape[0] + shape[1])) ** 0.5
        return std * jax.random.normal(k, shape, dtype=jnp.float32)

    params = {}
    params['embedding'] = 0.02 * jax.random.normal(ks[0], (VOCAB, EMB), dtype=jnp.float32)
    # x_context: Linear(4H+E -> E); weights stored transposed (in, out) so kernel does x @ W
    params['wxc'] = xavier(ks[1], (4 * HIDDEN + EMB, EMB))
    params['bxc'] = 1e-4 * jax.random.normal(ks[2], (1, EMB), dtype=jnp.float32)
    # LSTM (gate order i, f, g, o); forget-gate bias = 1 per init_lstm_wt
    params['wih'] = xavier(ks[3], (EMB, 4 * HIDDEN))
    params['whh'] = xavier(ks[4], (HIDDEN, 4 * HIDDEN))
    params['bih'] = jnp.zeros((4 * HIDDEN,), jnp.float32).at[HIDDEN:2 * HIDDEN].set(1.0).reshape(1, -1)
    params['bhh'] = jnp.zeros((1, 4 * HIDDEN), jnp.float32)
    # attention
    params['wdp'] = xavier(ks[5], (2 * HIDDEN, 2 * HIDDEN))
    params['bdp'] = 1e-4 * jax.random.normal(ks[6], (1, 2 * HIDDEN), dtype=jnp.float32)
    params['wv'] = xavier(ks[7], (2 * HIDDEN, 1))
    # pointer gate
    params['wpg'] = xavier(ks[8], (6 * HIDDEN + EMB, 1))
    params['bpg'] = jnp.zeros((1, 1), jnp.float32)
    # output projections
    params['w1'] = xavier(ks[9], (5 * HIDDEN, HIDDEN))
    params['b1'] = jnp.zeros((1, HIDDEN), jnp.float32)
    params['w2'] = xavier(ks[10], (HIDDEN, VOCAB))
    params['b2'] = 1e-4 * jax.random.normal(ks[11], (1, VOCAB), dtype=jnp.float32)
    return params


if __name__ == "__main__":
    key = jax.random.PRNGKey(0)
    kp, k1, k2, k3, k4, k5, k6, k7, k8, k9 = jax.random.split(key, 10)
    params = init_params(kp)
    packed = pack_params(params)        # one-time weight packing

    B, T = BATCH, T_K
    y_t_1 = jax.random.randint(k1, (B,), 0, VOCAB)
    h0 = jax.random.normal(k2, (1, B, HIDDEN), dtype=jnp.float32)
    c0 = jax.random.normal(k3, (1, B, HIDDEN), dtype=jnp.float32)
    graph_enc_outputs = jax.random.normal(k4, (B, T, 2 * HIDDEN), dtype=jnp.float32)
    ast_enc_outputs = jax.random.normal(k5, (B, T, 2 * HIDDEN), dtype=jnp.float32)
    graph_encoder_feature = jax.random.normal(k6, (B * T, 2 * HIDDEN), dtype=jnp.float32)
    ast_encoder_feature = jax.random.normal(k7, (B * T, 2 * HIDDEN), dtype=jnp.float32)
    enc_padding_mask = jnp.ones((B, T), jnp.float32).at[:, T - 2:].set(0.0)
    c_t_1 = jax.random.normal(k8, (B, 4 * HIDDEN), dtype=jnp.float32)
    extra_zeros = jnp.zeros((B, N_EXTRA), jnp.float32)
    enc_batch_extend_vocab = jax.random.randint(k9, (B, T), 0, VOCAB + N_EXTRA)
    coverage = None
    step = 1  # training / step>0 path

    decoder_step = jax.jit(decoder_forward)
    outs = decoder_step(packed, y_t_1, (h0, c0), graph_enc_outputs,
                        ast_enc_outputs, graph_encoder_feature,
                        ast_encoder_feature, enc_padding_mask, c_t_1,
                        extra_zeros, enc_batch_extend_vocab, coverage, step)
    final_dist, s_t, c_t, attn_dist, p_gen, cov = outs
    jax.block_until_ready(final_dist)

    assert final_dist.shape == (B, VOCAB + N_EXTRA)
    assert s_t[0].shape == (1, B, HIDDEN) and s_t[1].shape == (1, B, HIDDEN)
    assert c_t.shape == (B, 4 * HIDDEN)
    assert attn_dist.shape == (B, T)
    assert p_gen.shape == (B, 1)
    # final_dist should be a valid distribution (rows sum to ~1)
    row_sums = jnp.sum(final_dist, axis=1)
    assert bool(jnp.all(jnp.abs(row_sums - 1.0) < 1e-3))
    # attention must respect the padding mask
    assert bool(jnp.all(attn_dist[:, T - 2:] < 1e-6))

    print("KERNEL_OK")
</pallas_src>

<mosaic_0001>
module attributes {stable_mosaic.version = 11 : i64} {
  func.func @decoder_kernel(%arg0: memref<2x256xf32, #tpu.memory_space<vmem>>, %arg1: memref<4x8x64xf32, #tpu.memory_space<vmem>>, %arg2: memref<4x8x64xf32, #tpu.memory_space<vmem>>, %arg3: memref<2x8xf32, #tpu.memory_space<vmem>>, %arg4: memref<2x8xi32, #tpu.memory_space<vmem>>, %arg5: memref<480x128xf32, #tpu.memory_space<vmem>>, %arg6: memref<16x128xf32, #tpu.memory_space<vmem>>, %arg7: memref<2x512xf32, #tpu.memory_space<vmem>>) attributes {dimension_semantics = [], scalar_prefetch = 0 : i64, scratch_operands = 0 : i64, tpu.core_type = #tpu.core_type<tc>} {
    %c0 = arith.constant 0 : index
    %c0_0 = arith.constant 0 : index
    %0 = vector.load %arg0[%c0, %c0_0] : memref<2x256xf32, #tpu.memory_space<vmem>>, vector<2x256xf32>
    %1 = vector.extract_strided_slice %0 {offsets = [0, 0], sizes = [2, 128], strides = [1, 1]} : vector<2x256xf32> to vector<2x128xf32>
    %2 = vector.extract_strided_slice %0 {offsets = [0, 128], sizes = [2, 32], strides = [1, 1]} : vector<2x256xf32> to vector<2x32xf32>
    %3 = vector.extract_strided_slice %0 {offsets = [0, 160], sizes = [2, 32], strides = [1, 1]} : vector<2x256xf32> to vector<2x32xf32>
    %4 = vector.extract_strided_slice %0 {offsets = [0, 192], sizes = [2, 32], strides = [1, 1]} : vector<2x256xf32> to vector<2x32xf32>
    %c0_1 = arith.constant 0 : index
    %c0_2 = arith.constant 0 : index
    %5 = vector.load %arg6[%c0_1, %c0_2] : memref<16x128xf32, #tpu.memory_space<vmem>>, vector<16x128xf32>
    %6 = vector.extract_strided_slice %5 {offsets = [0, 0], sizes = [1, 128], strides = [1, 1]} : vector<16x128xf32> to vector<1x128xf32>
    %7 = vector.extract_strided_slice %5 {offsets = [1, 0], sizes = [1, 128], strides = [1, 1]} : vector<16x128xf32> to vector<1x128xf32>
    %8 = vector.extract_strided_slice %5 {offsets = [2, 0], sizes = [1, 128], strides = [1, 1]} : vector<16x128xf32> to vector<1x128xf32>
    %9 = vector.extract_strided_slice %5 {offsets = [3, 0], sizes = [1, 128], strides = [1, 1]} : vector<16x128xf32> to vector<1x128xf32>
    %10 = vector.extract_strided_slice %5 {offsets = [4, 0], sizes = [1, 128], strides = [1, 1]} : vector<16x128xf32> to vector<1x128xf32>
    %11 = vector.extract_strided_slice %5 {offsets = [5, 0], sizes = [1, 64], strides = [1, 1]} : vector<16x128xf32> to vector<1x64xf32>
    %12 = vector.extract_strided_slice %5 {offsets = [6, 0], sizes = [1, 128], strides = [1, 1]} : vector<16x128xf32> to vector<1x128xf32>
    %13 = vector.extract_strided_slice %5 {offsets = [7, 0], sizes = [1, 32], strides = [1, 1]} : vector<16x128xf32> to vector<1x32xf32>
    %14 = vector.extract_strided_slice %5 {offsets = [8, 0], sizes = [1, 32], strides = [1, 1]} : vector<16x128xf32> to vector<1x32xf32>
    %15 = vector.extract_strided_slice %5 {offsets = [9, 0], sizes = [1, 32], strides = [1, 1]} : vector<16x128xf32> to vector<1x32xf32>
    %16 = vector.extract_strided_slice %5 {offsets = [10, 0], sizes = [1, 1], strides = [1, 1]} : vector<16x128xf32> to vector<1x1xf32>
    %c0_3 = arith.constant 0 : index
    %c0_4 = arith.constant 0 : index
    %17 = vector.load %arg5[%c0_3, %c0_4] : memref<480x128xf32, #tpu.memory_space<vmem>>, vector<128x128xf32>
    %cst = arith.constant dense<0.000000e+00> : vector<2x128xf32>
    %18 = tpu.matmul %1, %17, %cst {dimension_numbers = #tpu.dot_dimension_numbers<[1], [0], [0], [1], [0, 0, 1, 1], [], []>} : vector<2x128xf32>, vector<128x128xf32>, vector<2x128xf32> -> vector<2x128xf32>
    %c128 = arith.constant 128 : index
    %c0_5 = arith.constant 0 : index
    %19 = vector.load %arg5[%c128, %c0_5] : memref<480x128xf32, #tpu.memory_space<vmem>>, vector<32x128xf32>
    %cst_6 = arith.constant dense<0.000000e+00> : vector<2x128xf32>
    %20 = tpu.matmul %2, %19, %cst_6 {dimension_numbers = #tpu.dot_dimension_numbers<[1], [0], [0], [1], [0, 0, 1, 1], [], []>} : vector<2x32xf32>, vector<32x128xf32>, vector<2x128xf32> -> vector<2x128xf32>
    %21 = arith.addf %18, %20 : vector<2x128xf32>
    %22 = vector.broadcast %6 : vector<1x128xf32> to vector<2x128xf32>
    %23 = arith.addf %21, %22 : vector<2x128xf32>
    %24 = vector.extract_strided_slice %23 {offsets = [0, 0], sizes = [2, 32], strides = [1, 1]} : vector<2x128xf32> to vector<2x32xf32>
    %c160 = arith.constant 160 : index
    %c0_7 = arith.constant 0 : index
    %25 = vector.load %arg5[%c160, %c0_7] : memref<480x128xf32, #tpu.memory_space<vmem>>, vector<32x128xf32>
    %cst_8 = arith.constant dense<0.000000e+00> : vector<2x128xf32>
    %26 = tpu.matmul %24, %25, %cst_8 {dimension_numbers = #tpu.dot_dimension_numbers<[1], [0], [0], [1], [0, 0, 1, 1], [], []>} : vector<2x32xf32>, vector<32x128xf32>, vector<2x128xf32> -> vector<2x128xf32>
    %c192 = arith.constant 192 : index
    %c0_9 = arith.constant 0 : index
    %27 = vector.load %arg5[%c192, %c0_9] : memref<480x128xf32, #tpu.memory_space<vmem>>, vector<32x128xf32>
    %cst_10 = arith.constant dense<0.000000e+00> : vector<2x128xf32>
    %28 = tpu.matmul %3, %27, %cst_10 {dimension_numbers = #tpu.dot_dimension_numbers<[1], [0], [0], [1], [0, 0, 1, 1], [], []>} : vector<2x32xf32>, vector<32x128xf32>, vector<2x128xf32> -> vector<2x128xf32>
    %29 = arith.addf %26, %28 : vector<2x128xf32>
    %30 = vector.broadcast %7 : vector<1x128xf32> to vector<2x128xf32>
    %31 = arith.addf %29, %30 : vector<2x128xf32>
    %32 = vector.extract_strided_slice %31 {offsets = [0, 0], sizes = [2, 32], strides = [1, 1]} : vector<2x128xf32> to vector<2x32xf32>
    %33 = arith.negf %32 : vector<2x32xf32>
    %34 = math.exp %33 : vector<2x32xf32>
    %cst_11 = arith.constant 1.000000e+00 : f32
    %35 = vector.broadcast %cst_11 : f32 to vector<2x32xf32>
    %36 = arith.addf %35, %34 : vector<2x32xf32>
    %37 = arith.divf %35, %36 : vector<2x32xf32>
    %38 = vector.extract_strided_slice %31 {offsets = [0, 32], sizes = [2, 32], strides = [1, 1]} : vector<2x128xf32> to vector<2x32xf32>
    %39 = arith.negf %38 : vector<2x32xf32>
    %40 = math.exp %39 : vector<2x32xf32>
    %cst_12 = arith.constant 1.000000e+00 : f32
    %41 = vector.broadcast %cst_12 : f32 to vector<2x32xf32>
    %42 = arith.addf %41, %40 : vector<2x32xf32>
    %43 = arith.divf %41, %42 : vector<2x32xf32>
    %44 = vector.extract_strided_slice %31 {offsets = [0, 64], sizes = [2, 32], strides = [1, 1]} : vector<2x128xf32> to vector<2x32xf32>
    %45 = math.tanh %44 : vector<2x32xf32>
    %46 = vector.extract_strided_slice %31 {offsets = [0, 96], sizes = [2, 32], strides = [1, 1]} : vector<2x128xf32> to vector<2x32xf32>
    %47 = arith.negf %46 : vector<2x32xf32>
    %48 = math.exp %47 : vector<2x32xf32>
    %cst_13 = arith.constant 1.000000e+00 : f32
    %49 = vector.broadcast %cst_13 : f32 to vector<2x32xf32>
    %50 = arith.addf %49, %48 : vector<2x32xf32>
    %51 = arith.divf %49, %50 : vector<2x32xf32>
    %52 = arith.mulf %43, %4 : vector<2x32xf32>
    %53 = arith.mulf %37, %45 : vector<2x32xf32>
    %54 = arith.addf %52, %53 : vector<2x32xf32>
    %55 = math.tanh %54 : vector<2x32xf32>
    %56 = arith.mulf %51, %55 : vector<2x32xf32>
    %c224 = arith.constant 224 : index
    %c0_14 = arith.constant 0 : index
    %57 = vector.load %arg5[%c224, %c0_14] : memref<480x128xf32, #tpu.memory_space<vmem>>, vector<32x128xf32>
    %cst_15 = arith.constant dense<0.000000e+00> : vector<2x128xf32>
    %58 = tpu.matmul %56, %57, %cst_15 {dimension_numbers = #tpu.dot_dimension_numbers<[1], [0], [0], [1], [0, 0, 1, 1], [], []>} : vector<2x32xf32>, vector<32x128xf32>, vector<2x128xf32> -> vector<2x128xf32>
    %c256 = arith.constant 256 : index
    %c0_16 = arith.constant 0 : index
    %59 = vector.load %arg5[%c256, %c0_16] : memref<480x128xf32, #tpu.memory_space<vmem>>, vector<32x128xf32>
    %cst_17 = arith.constant dense<0.000000e+00> : vector<2x128xf32>
    %60 = tpu.matmul %54, %59, %cst_17 {dimension_numbers = #tpu.dot_dimension_numbers<[1], [0], [0], [1], [0, 0, 1, 1], [], []>} : vector<2x32xf32>, vector<32x128xf32>, vector<2x128xf32> -> vector<2x128xf32>
    %61 = arith.addf %58, %60 : vector<2x128xf32>
    %62 = vector.broadcast %8 : vector<1x128xf32> to vector<2x128xf32>
    %63 = arith.addf %61, %62 : vector<2x128xf32>
    %64 = vector.extract_strided_slice %63 {offsets = [0, 0], sizes = [2, 64], strides = [1, 1]} : vector<2x128xf32> to vector<2x64xf32>
    %65 = tpu.concatenate %64, %64 in 0 : vector<2x64xf32>, vector<2x64xf32> -> vector<4x64xf32>
    %c0_18 = arith.constant 0 : index
    %c0_19 = arith.constant 0 : index
    %66 = vector.load %arg3[%c0_18, %c0_19] : memref<2x8xf32, #tpu.memory_space<vmem>>, vector<2x8xf32>
    %67 = tpu.concatenate %66, %66 in 0 : vector<2x8xf32>, vector<2x8xf32> -> vector<4x8xf32>
    %c0_20 = arith.constant 0 : index
    %c0_21 = arith.constant 0 : index
    %c0_22 = arith.constant 0 : index
    %68 = vector.load %arg2[%c0_20, %c0_21, %c0_22] : memref<4x8x64xf32, #tpu.memory_space<vmem>>, vector<4x8x64xf32>
    %69 = vector.shape_cast %65 : vector<4x64xf32> to vector<4x1x64xf32>
    %70 = vector.broadcast %69 : vector<4x1x64xf32> to vector<4x8x64xf32>
    %71 = arith.addf %68, %70 : vector<4x8x64xf32>
    %72 = math.tanh %71 : vector<4x8x64xf32>
    %73 = vector.shape_cast %11 : vector<1x64xf32> to vector<1x1x64xf32>
    %74 = vector.broadcast %73 : vector<1x1x64xf32> to vector<4x8x64xf32>
    %75 = arith.mulf %72, %74 : vector<4x8x64xf32>
    %cst_23 = arith.constant dense<0.000000e+00> : vector<4x8xf32>
    %76 = vector.multi_reduction <add>, %75, %cst_23 [2] : vector<4x8x64xf32> to vector<4x8xf32>
    %cst_24 = arith.constant 1.000000e+00 : f32
    %77 = vector.broadcast %cst_24 : f32 to vector<4x8xf32>
    %78 = arith.subf %67, %77 : vector<4x8xf32>
    %cst_25 = arith.constant 1.000000e+09 : f32
    %79 = vector.broadcast %cst_25 : f32 to vector<4x8xf32>
    %80 = arith.mulf %78, %79 : vector<4x8xf32>
    %81 = arith.addf %76, %80 : vector<4x8xf32>
    %cst_26 = arith.constant dense<0xFF800000> : vector<4xf32>
    %82 = vector.multi_reduction <maximumf>, %81, %cst_26 [1] : vector<4x8xf32> to vector<4xf32>
    %83 = vector.shape_cast %82 : vector<4xf32> to vector<4x1xf32>
    %84 = vector.broadcast %83 : vector<4x1xf32> to vector<4x8xf32>
    %85 = arith.subf %81, %84 : vector<4x8xf32>
    %86 = math.exp %85 : vector<4x8xf32>
    %cst_27 = arith.constant dense<0.000000e+00> : vector<4xf32>
    %87 = vector.multi_reduction <add>, %86, %cst_27 [1] : vector<4x8xf32> to vector<4xf32>
    %88 = vector.shape_cast %87 : vector<4xf32> to vector<4x1xf32>
    %89 = tpu.reciprocal %88 {approx = true} : vector<4x1xf32> -> vector<4x1xf32>
    %90 = vector.broadcast %89 : vector<4x1xf32> to vector<4x8xf32>
    %91 = arith.mulf %86, %90 : vector<4x8xf32>
    %92 = vector.shape_cast %91 : vector<4x8xf32> to vector<4x8x1xf32>
    %c0_28 = arith.constant 0 : index
    %c0_29 = arith.constant 0 : index
    %c0_30 = arith.constant 0 : index
    %93 = vector.load %arg1[%c0_28, %c0_29, %c0_30] : memref<4x8x64xf32, #tpu.memory_space<vmem>>, vector<4x8x64xf32>
    %94 = vector.broadcast %92 : vector<4x8x1xf32> to vector<4x8x64xf32>
    %95 = arith.mulf %94, %93 : vector<4x8x64xf32>
    %cst_31 = arith.constant dense<0.000000e+00> : vector<4x64xf32>
    %96 = vector.multi_reduction <add>, %95, %cst_31 [1] : vector<4x8x64xf32> to vector<4x64xf32>
    %97 = vector.extract_strided_slice %96 {offsets = [0, 0], sizes = [2, 64], strides = [1, 1]} : vector<4x64xf32> to vector<2x64xf32>
    %98 = vector.extract_strided_slice %96 {offsets = [2, 0], sizes = [2, 64], strides = [1, 1]} : vector<4x64xf32> to vector<2x64xf32>
    %99 = tpu.concatenate %97, %98 in 1 : vector<2x64xf32>, vector<2x64xf32> -> vector<2x128xf32>
    %100 = vector.extract_strided_slice %91 {offsets = [0, 0], sizes = [2, 8], strides = [1, 1]} : vector<4x8xf32> to vector<2x8xf32>
    %101 = vector.extract_strided_slice %91 {offsets = [2, 0], sizes = [2, 8], strides = [1, 1]} : vector<4x8xf32> to vector<2x8xf32>
    %102 = arith.addf %100, %101 : vector<2x8xf32>
    %cst_32 = arith.constant dense<0.000000e+00> : vector<2xf32>
    %103 = vector.multi_reduction <add>, %102, %cst_32 [1] : vector<2x8xf32> to vector<2xf32>
    %104 = vector.shape_cast %103 : vector<2xf32> to vector<2x1xf32>
    %105 = vector.broadcast %104 : vector<2x1xf32> to vector<2x8xf32>
    %106 = arith.divf %102, %105 : vector<2x8xf32>
    %107 = vector.broadcast %12 : vector<1x128xf32> to vector<2x128xf32>
    %108 = arith.mulf %99, %107 : vector<2x128xf32>
    %cst_33 = arith.constant dense<0.000000e+00> : vector<2xf32>
    %109 = vector.multi_reduction <add>, %108, %cst_33 [1] : vector<2x128xf32> to vector<2xf32>
    %110 = vector.shape_cast %109 : vector<2xf32> to vector<2x1xf32>
    %111 = vector.broadcast %13 : vector<1x32xf32> to vector<2x32xf32>
    %112 = arith.mulf %56, %111 : vector<2x32xf32>
    %cst_34 = arith.constant dense<0.000000e+00> : vector<2xf32>
    %113 = vector.multi_reduction <add>, %112, %cst_34 [1] : vector<2x32xf32> to vector<2xf32>
    %114 = vector.shape_cast %113 : vector<2xf32> to vector<2x1xf32>
    %115 = arith.addf %110, %114 : vector<2x1xf32>
    %116 = vector.broadcast %14 : vector<1x32xf32> to vector<2x32xf32>
    %117 = arith.mulf %54, %116 : vector<2x32xf32>
    %cst_35 = arith.constant dense<0.000000e+00> : vector<2xf32>
    %118 = vector.multi_reduction <add>, %117, %cst_35 [1] : vector<2x32xf32> to vector<2xf32>
    %119 = vector.shape_cast %118 : vector<2xf32> to vector<2x1xf32>
    %120 = arith.addf %115, %119 : vector<2x1xf32>
    %121 = vector.broadcast %15 : vector<1x32xf32> to vector<2x32xf32>
    %122 = arith.mulf %24, %121 : vector<2x32xf32>
    %cst_36 = arith.constant dense<0.000000e+00> : vector<2xf32>
    %123 = vector.multi_reduction <add>, %122, %cst_36 [1] : vector<2x32xf32> to vector<2xf32>
    %124 = vector.shape_cast %123 : vector<2xf32> to vector<2x1xf32>
    %125 = arith.addf %120, %124 : vector<2x1xf32>
    %126 = vector.broadcast %16 : vector<1x1xf32> to vector<2x1xf32>
    %127 = arith.addf %125, %126 : vector<2x1xf32>
    %128 = arith.negf %127 : vector<2x1xf32>
    %129 = math.exp %128 : vector<2x1xf32>
    %cst_37 = arith.constant 1.000000e+00 : f32
    %130 = vector.broadcast %cst_37 : f32 to vector<2x1xf32>
    %131 = arith.addf %130, %129 : vector<2x1xf32>
    %132 = arith.divf %130, %131 : vector<2x1xf32>
    %c288 = arith.constant 288 : index
    %c0_38 = arith.constant 0 : index
    %133 = vector.load %arg5[%c288, %c0_38] : memref<480x128xf32, #tpu.memory_space<vmem>>, vector<32x128xf32>
    %cst_39 = arith.constant dense<0.000000e+00> : vector<2x128xf32>
    %134 = tpu.matmul %56, %133, %cst_39 {dimension_numbers = #tpu.dot_dimension_numbers<[1], [0], [0], [1], [0, 0, 1, 1], [], []>} : vector<2x32xf32>, vector<32x128xf32>, vector<2x128xf32> -> vector<2x128xf32>
    %c320 = arith.constant 320 : index
    %c0_40 = arith.constant 0 : index
    %135 = vector.load %arg5[%c320, %c0_40] : memref<480x128xf32, #tpu.memory_space<vmem>>, vector<128x128xf32>
    %cst_41 = arith.constant dense<0.000000e+00> : vector<2x128xf32>
    %136 = tpu.matmul %99, %135, %cst_41 {dimension_numbers = #tpu.dot_dimension_numbers<[1], [0], [0], [1], [0, 0, 1, 1], [], []>} : vector<2x128xf32>, vector<128x128xf32>, vector<2x128xf32> -> vector<2x128xf32>
    %137 = arith.addf %134, %136 : vector<2x128xf32>
    %138 = vector.broadcast %9 : vector<1x128xf32> to vector<2x128xf32>
    %139 = arith.addf %137, %138 : vector<2x128xf32>
    %140 = math.tanh %139 : vector<2x128xf32>
    %141 = vector.extract_strided_slice %140 {offsets = [0, 0], sizes = [2, 32], strides = [1, 1]} : vector<2x128xf32> to vector<2x32xf32>
    %c448 = arith.constant 448 : index
    %c0_42 = arith.constant 0 : index
    %142 = vector.load %arg5[%c448, %c0_42] : memref<480x128xf32, #tpu.memory_space<vmem>>, vector<32x128xf32>
    %cst_43 = arith.constant dense<0.000000e+00> : vector<2x128xf32>
    %143 = tpu.matmul %141, %142, %cst_43 {dimension_numbers = #tpu.dot_dimension_numbers<[1], [0], [0], [1], [0, 0, 1, 1], [], []>} : vector<2x32xf32>, vector<32x128xf32>, vector<2x128xf32> -> vector<2x128xf32>
    %144 = vector.broadcast %10 : vector<1x128xf32> to vector<2x128xf32>
    %145 = arith.addf %143, %144 : vector<2x128xf32>
    %cst_44 = arith.constant dense<0xFF800000> : vector<2xf32>
    %146 = vector.multi_reduction <maximumf>, %145, %cst_44 [1] : vector<2x128xf32> to vector<2xf32>
    %147 = vector.shape_cast %146 : vector<2xf32> to vector<2x1xf32>
    %148 = vector.broadcast %147 : vector<2x1xf32> to vector<2x128xf32>
    %149 = arith.subf %145, %148 : vector<2x128xf32>
    %150 = math.exp %149 : vector<2x128xf32>
    %cst_45 = arith.constant dense<0.000000e+00> : vector<2xf32>
    %151 = vector.multi_reduction <add>, %150, %cst_45 [1] : vector<2x128xf32> to vector<2xf32>
    %152 = vector.shape_cast %151 : vector<2xf32> to vector<2x1xf32>
    %153 = vector.broadcast %152 : vector<2x1xf32> to vector<2x128xf32>
    %154 = arith.divf %150, %153 : vector<2x128xf32>
    %155 = vector.broadcast %132 : vector<2x1xf32> to vector<2x128xf32>
    %156 = arith.mulf %155, %154 : vector<2x128xf32>
    %cst_46 = arith.constant 1.000000e+00 : f32
    %157 = vector.broadcast %cst_46 : f32 to vector<2x1xf32>
    %158 = arith.subf %157, %132 : vector<2x1xf32>
    %159 = vector.broadcast %158 : vector<2x1xf32> to vector<2x8xf32>
    %160 = arith.mulf %159, %106 : vector<2x8xf32>
    %c0_47 = arith.constant 0 : index
    %c0_48 = arith.constant 0 : index
    %161 = vector.load %arg4[%c0_47, %c0_48] : memref<2x8xi32, #tpu.memory_space<vmem>>, vector<2x8xi32>
    %162 = tpu.iota {dimensions = array<i32: 2>} : vector<2x8x256xi32>
    %163 = vector.shape_cast %161 : vector<2x8xi32> to vector<2x8x1xi32>
    %164 = vector.broadcast %163 : vector<2x8x1xi32> to vector<2x8x256xi32>
    %165 = arith.cmpi eq, %164, %162 : vector<2x8x256xi32>
    %166 = arith.extui %165 : vector<2x8x256xi1> to vector<2x8x256xi32>
    %167 = arith.sitofp %166 : vector<2x8x256xi32> to vector<2x8x256xf32>
    %168 = vector.shape_cast %160 : vector<2x8xf32> to vector<2x8x1xf32>
    %169 = vector.broadcast %168 : vector<2x8x1xf32> to vector<2x8x256xf32>
    %170 = arith.mulf %169, %167 : vector<2x8x256xf32>
    %cst_49 = arith.constant dense<0.000000e+00> : vector<2x256xf32>
    %171 = vector.multi_reduction <add>, %170, %cst_49 [1] : vector<2x8x256xf32> to vector<2x256xf32>
    %cst_50 = arith.constant 0.000000e+00 : f32
    %172 = vector.broadcast %cst_50 : f32 to vector<2x128xf32>
    %173 = tpu.concatenate %156, %172 in 1 : vector<2x128xf32>, vector<2x128xf32> -> vector<2x256xf32>
    %174 = arith.addf %173, %171 : vector<2x256xf32>
    %cst_51 = arith.constant 0.000000e+00 : f32
    %175 = vector.broadcast %cst_51 : f32 to vector<2x55xf32>
    %176 = tpu.concatenate %174, %56, %54, %99, %106, %132, %175 in 1 : vector<2x256xf32>, vector<2x32xf32>, vector<2x32xf32>, vector<2x128xf32>, vector<2x8xf32>, vector<2x1xf32>, vector<2x55xf32> -> vector<2x512xf32>
    %c0_52 = arith.constant 0 : index
    %c0_53 = arith.constant 0 : index
    %177 = vector.load %arg7[%c0_52, %c0_53] : memref<2x512xf32, #tpu.memory_space<vmem>>, vector<2x512xf32>
    tpu.vector_store %arg7[%c0_52, %c0_53], %176 {strides = array<i32>} : memref<2x512xf32, #tpu.memory_space<vmem>>, vector<2x512xf32>,
    return
  }
}

</mosaic_0001>

<llo_original>
// kernel: decoder_forward.1
$region0: #{decoder_forward.1}
  #allocation0 [shape = 'u32[]', space=smem, size = 0x4, offset = 0x4, fixed_abs, tag = 'smem constant byte address 0x4 - core index']
  #allocation1 [shape = 'u32[144,128]{1,0:T(1,128)}', space=vmem, size = 0x12000, scoped, tag = 'internal scratch']
  %s0 = inlined_call_operand.vmem [shape: f32[2,256], index: 0, kind: input, shape index: {}]
  %s1 = inlined_call_operand.vmem [shape: f32[4,8,64], index: 1, kind: input, shape index: {}]
  %s2 = inlined_call_operand.vmem [shape: f32[4,8,64], index: 2, kind: input, shape index: {}]
  %s3 = inlined_call_operand.vmem [shape: f32[2,8], index: 3, kind: input, shape index: {}]
  %s4 = inlined_call_operand.vmem [shape: s32[2,8], index: 4, kind: input, shape index: {}]
  %s5 = inlined_call_operand.hbm [shape: f32[480,128], index: 5, kind: input, shape index: {}]
  %s6 = inlined_call_operand.vmem [shape: f32[16,128], index: 6, kind: input, shape index: {}]
  %s7 = inlined_call_operand.vmem [shape: f32[2,512], index: 7, kind: output, shape index: {}]
  %s8 = sld [smem:[#allocation0]]
  $region42: #{decoder_forward.1} parent=0
    _
  %s10 = ssub.s32 1, %s8
  %s11 = scalar_select 0, %s10, %s8
  $region1: #{decoder_forward.1} parent=0
    #allocation2 [shape = 'u8[245760]{0}', space=vmem, size = 0x3c000, scoped, tag = 'input window, operand 5, single buffered']
    #allocation3 [shape = 's32[1]{0}', space=sflag, size = 0x4, scoped, tag = 'scoped memory for decoder_forward.1']
    %12 = vsyncpa [#allocation3], 0
    // Predicated region
    $region2: #{decoder_forward.1} parent=1 // pred_check
      _
    $region3: #{decoder_forward.1} parent=1 // pred_check_branch
      %14 = sbr.rel (0) target = $region5
    $region4: #{decoder_forward.1} parent=1 // pred_region
      _
    $region5: #{decoder_forward.1} parent=1 // pred_fallthru
      _
    // Predicated region
    $region6: #{decoder_forward.1} parent=1 // pred_check
      _
    $region7: #{decoder_forward.1} parent=1 // pred_check_branch
      %16 = sbr.rel (0) target = $region9
    $region8: #{decoder_forward.1} parent=1 // pred_region
      _
    $region9: #{decoder_forward.1} parent=1 // pred_fallthru
      _
    // Predicated region
    $region10: #{decoder_forward.1} parent=1 // pred_check
      _
    $region11: #{decoder_forward.1} parent=1 // pred_check_branch
      %18 = sbr.rel (0) target = $region13
    $region12: #{decoder_forward.1} parent=1 // pred_region
      _
    $region13: #{decoder_forward.1} parent=1 // pred_fallthru
      _
    // Predicated region
    $region14: #{decoder_forward.1} parent=1 // pred_check
      _
    $region15: #{decoder_forward.1} parent=1 // pred_check_branch
      %20 = sbr.rel (0) target = $region17
    $region16: #{decoder_forward.1} parent=1 // pred_region
      _
    $region17: #{decoder_forward.1} parent=1 // pred_fallthru
      _
    // Predicated region
    $region18: #{decoder_forward.1} parent=1 // pred_check
      _
    $region19: #{decoder_forward.1} parent=1 // pred_check_branch
      %22 = sbr.rel (0) target = $region21
    $region20: #{decoder_forward.1} parent=1 // pred_region
      _
    $region21: #{decoder_forward.1} parent=1 // pred_fallthru
      _
    // Predicated region
    $region22: #{decoder_forward.1} parent=1 // pred_check
      _
    $region23: #{decoder_forward.1} parent=1 // pred_check_branch
      %24 = sbr.rel (0) target = $region25
    $region24: #{decoder_forward.1} parent=1 // pred_region
      %s26 = ssub.s32 7680, 7680
      %27 = vsyncadd [#allocation3], %s26
      %s28 = sshll.u32 [#allocation2], 4
      %s29 = int_to_ptr.vmem [resolvable:$true] %s28
      %34 = dma.hbm_to_vmem [thread:$0]  %s5, 7680, %s29, [#allocation3], 128, 128, 8
    $region25: #{decoder_forward.1} parent=1 // pred_fallthru
      _
    // Predicated region
    $region26: #{decoder_forward.1} parent=1 // pred_check
      _
    $region27: #{decoder_forward.1} parent=1 // pred_check_branch
      %36 = sbr.rel (0) target = $region29
    $region28: #{decoder_forward.1} parent=1 // pred_region
      _
    $region29: #{decoder_forward.1} parent=1 // pred_fallthru
      _
    // Predicated region
    $region30: #{decoder_forward.1} parent=1 // pred_check
      _
    $region31: #{decoder_forward.1} parent=1 // pred_check_branch
      %38 = sbr.rel (0) target = $region33
    $region32: #{decoder_forward.1} parent=1 // pred_region
      %39 = dma.done [#allocation3], 7680
    $region33: #{decoder_forward.1} parent=1 // pred_fallthru
      _
    %v40 = vld [vmem:[%s0] sm:$0xf]
    %v41 = vld [vmem:[%s6] sm:$0xff]
    %v42 = vld [vmem:[%s6 + $0x8] sm:$0xff]
    %v43 = vld [vmem:[#allocation2] sm:$0xff]
    %v44 = vld [vmem:[#allocation2 + $0x8] sm:$0xff]
    %v45 = vld [vmem:[#allocation2 + $0x10] sm:$0xff]
    %v46 = vld [vmem:[#allocation2 + $0x18] sm:$0xff]
    %v47 = vld [vmem:[#allocation2 + $0x20] sm:$0xff]
    %v48 = vld [vmem:[#allocation2 + $0x28] sm:$0xff]
    %v49 = vld [vmem:[#allocation2 + $0x30] sm:$0xff]
    %v50 = vld [vmem:[#allocation2 + $0x38] sm:$0xff]
    %v51 = vld [vmem:[#allocation2 + $0x40] sm:$0xff]
    %v52 = vld [vmem:[#allocation2 + $0x48] sm:$0xff]
    %v53 = vld [vmem:[#allocation2 + $0x50] sm:$0xff]
    %v54 = vld [vmem:[#allocation2 + $0x58] sm:$0xff]
    %v55 = vld [vmem:[#allocation2 + $0x60] sm:$0xff]
    %v56 = vld [vmem:[#allocation2 + $0x68] sm:$0xff]
    %v57 = vld [vmem:[#allocation2 + $0x70] sm:$0xff]
    %v58 = vld [vmem:[#allocation2 + $0x78] sm:$0xff]
    %v59 = vld [vmem:[#allocation2 + $0x80] sm:$0xff]
    %v60 = vld [vmem:[#allocation2 + $0x88] sm:$0xff]
    %v61 = vld [vmem:[#allocation2 + $0x90] sm:$0xff]
    %v62 = vld [vmem:[#allocation2 + $0x98] sm:$0xff]
    %v65 = vunpack.c.l.s4 1983009808
    %v66 = vunpack.c.0.s8 %v65
    %v67 = vlaneseq
    %v68 = vshrl.u32 %v67, 7
    %v69 = vsub.s32 %v66, %v68
    %v70 = vrot.slane %v40, %v69
    %v71 = vcombine.high %v70, %v70
    %vm72 = vcmask 261120
    %v73 = vsel %vm72, %v71, 0
    %75 = vmatprep.subr.mxu0 0.0
    %76 = vmatpush1.msra.mxu0 %v59
    %77 = vmatprep.subr.mxu0 0.0
    %78 = vmatpush1.msra.mxu0 %v60
    %79 = vmatprep.subr.mxu0 0.0
    %80 = vmatpush1.msra.mxu0 %v61
    %81 = vmatprep.subr.mxu0 0.0
    %82 = vmatpush1.msra.mxu0 %v62
    %83 = vmatprep.subr.mxu0 0.0
    %84 = vmatpush1.msra.mxu0 0.0
    %85 = vmatprep.subr.mxu0 0.0
    %86 = vmatpush1.msra.mxu0 0.0
    %87 = vmatprep.subr.mxu0 0.0
    %88 = vmatpush1.msra.mxu0 0.0
    %89 = vmatprep.subr.mxu0 0.0
    %90 = vmatpush1.msra.mxu0 0.0
    %91 = vmatprep.subr.mxu0 0.0
    %92 = vmatpush1.msra.mxu0 0.0
    %93 = vmatprep.subr.mxu0 0.0
    %94 = vmatpush1.msra.mxu0 0.0
    %95 = vmatprep.subr.mxu0 0.0
    %96 = vmatpush1.msra.mxu0 0.0
    %97 = vmatprep.subr.mxu0 0.0
    %98 = vmatpush1.msra.mxu0 0.0
    %99 = vmatprep.subr.mxu0 0.0
    %100 = vmatpush1.msra.mxu0 0.0
    %101 = vmatprep.subr.mxu0 0.0
    %102 = vmatpush1.msra.mxu0 0.0
    %103 = vmatprep.subr.mxu0 0.0
    %104 = vmatpush1.msra.mxu0 0.0
    %105 = vmatprep.subr.mxu0 0.0
    %106 = vmatpush1.msra.mxu0 0.0
    %107 = vmatprep.subr.mxu0 0.0
    %108 = vmatpush1.msra.mxu0 0.0
    %109 = vmatprep.subr.mxu0 0.0
    %110 = vmatpush1.msra.mxu0 0.0
    %111 = vmatprep.subr.mxu0 0.0
    %112 = vmatpush1.msra.mxu0 0.0
    %113 = vmatprep.subr.mxu0 0.0
    %114 = vmatpush1.msra.mxu0 0.0
    %115 = vmatprep.subr.mxu0 0.0
    %116 = vmatpush1.msra.mxu0 0.0
    %117 = vmatprep.subr.mxu0 0.0
    %118 = vmatpush1.msra.mxu0 0.0
    %119 = vmatprep.subr.mxu0 0.0
    %120 = vmatpush1.msra.mxu0 0.0
    %121 = vmatprep.subr.mxu0 0.0
    %122 = vmatpush1.msra.mxu0 0.0
    %123 = vmatprep.subr.mxu0 0.0
    %124 = vmatpush1.msra.mxu0 0.0
    %125 = vmatprep.subr.mxu0 0.0
    %126 = vmatpush1.msra.mxu0 0.0
    %127 = vmatprep.subr.mxu0 0.0
    %128 = vmatpush1.msra.mxu0 0.0
    %129 = vmatprep.subr.mxu0 0.0
    %130 = vmatpush1.msra.mxu0 0.0
    %131 = vmatprep.subr.mxu0 0.0
    %132 = vmatpush1.msra.mxu0 0.0
    %133 = vmatprep.subr.mxu0 0.0
    %134 = vmatpush1.msra.mxu0 0.0
    %135 = vmatprep.subr.mxu0 0.0
    %136 = vmatpush1.msra.mxu0 0.0
    %137 = vmatprep.subr.mxu0 0.0
    %138 = vmatpush1.msra.mxu0 0.0
    %139 = vmatprep.mubr.f32.mxu0 0.0
    %140 = vmatmul.mubr.f32.gmra.mrb[0].mxu0 %v73
    %v141 = vpop.f32.mrb[0].mxu0
    %v142 = vadd.f32 0.0, %v141
    %v143 = vpop.f32.mrb[0].mxu0
    %144 = vdwg.mxu0
    %145 = vmatprep.subr.mxu0 0.0
    %146 = vmatpush1.msra.mxu0 %v43
    %147 = vmatprep.subr.mxu0 0.0
    %148 = vmatpush1.msra.mxu0 %v44
    %149 = vmatprep.subr.mxu0 0.0
    %150 = vmatpush1.msra.mxu0 %v45
    %151 = vmatprep.subr.mxu0 0.0
    %152 = vmatpush1.msra.mxu0 %v46
    %153 = vmatprep.subr.mxu0 0.0
    %154 = vmatpush1.msra.mxu0 %v47
    %155 = vmatprep.subr.mxu0 0.0
    %156 = vmatpush1.msra.mxu0 %v48
    %157 = vmatprep.subr.mxu0 0.0
    %158 = vmatpush1.msra.mxu0 %v49
    %159 = vmatprep.subr.mxu0 0.0
    %160 = vmatpush1.msra.mxu0 %v50
    %161 = vmatprep.subr.mxu0 0.0
    %162 = vmatpush1.msra.mxu0 %v51
    %163 = vmatprep.subr.mxu0 0.0
    %164 = vmatpush1.msra.mxu0 %v52
    %165 = vmatprep.subr.mxu0 0.0
    %166 = vmatpush1.msra.mxu0 %v53
    %167 = vmatprep.subr.mxu0 0.0
    %168 = vmatpush1.msra.mxu0 %v54
    %169 = vmatprep.subr.mxu0 0.0
    %170 = vmatpush1.msra.mxu0 %v55
    %171 = vmatprep.subr.mxu0 0.0
    %172 = vmatpush1.msra.mxu0 %v56
    %173 = vmatprep.subr.mxu0 0.0
    %174 = vmatpush1.msra.mxu0 %v57
    %175 = vmatprep.subr.mxu0 0.0
    %176 = vmatpush1.msra.mxu0 %v58
    %177 = vmatprep.subr.mxu0 0.0
    %178 = vmatpush1.msra.mxu0 0.0
    %179 = vmatprep.subr.mxu0 0.0
    %180 = vmatpush1.msra.mxu0 0.0
    %181 = vmatprep.subr.mxu0 0.0
    %182 = vmatpush1.msra.mxu0 0.0
    %183 = vmatprep.subr.mxu0 0.0
    %184 = vmatpush1.msra.mxu0 0.0
    %185 = vmatprep.subr.mxu0 0.0
    %186 = vmatpush1.msra.mxu0 0.0
    %187 = vmatprep.subr.mxu0 0.0
    %188 = vmatpush1.msra.mxu0 0.0
    %189 = vmatprep.subr.mxu0 0.0
    %190 = vmatpush1.msra.mxu0 0.0
    %191 = vmatprep.subr.mxu0 0.0
    %192 = vmatpush1.msra.mxu0 0.0
    %193 = vmatprep.subr.mxu0 0.0
    %194 = vmatpush1.msra.mxu0 0.0
    %195 = vmatprep.subr.mxu0 0.0
    %196 = vmatpush1.msra.mxu0 0.0
    %197 = vmatprep.subr.mxu0 0.0
    %198 = vmatpush1.msra.mxu0 0.0
    %199 = vmatprep.subr.mxu0 0.0
    %200 = vmatpush1.msra.mxu0 0.0
    %201 = vmatprep.subr.mxu0 0.0
    %202 = vmatpush1.msra.mxu0 0.0
    %203 = vmatprep.subr.mxu0 0.0
    %204 = vmatpush1.msra.mxu0 0.0
    %205 = vmatprep.subr.mxu0 0.0
    %206 = vmatpush1.msra.mxu0 0.0
    %207 = vmatprep.subr.mxu0 0.0
    %208 = vmatpush1.msra.mxu0 0.0
    %209 = vmatprep.mubr.f32.mxu0 0.0
    %210 = vmatmul.mubr.f32.gmra.mrb[0].mxu0 %v40
    %v211 = vpop.f32.mrb[0].mxu0
    %v212 = vadd.f32 %v142, %v211
    %v213 = vpop.f32.mrb[0].mxu0
    %214 = vdwg.mxu0
    %v215 = vlaneseq
    %v216 = vshrl.u32 %v215, 7
    %v217 = vsub.s32 0, %v216
    %v218 = vrot.slane %v41, %v217
    %v219 = vadd.f32 %v212, %v218
    %v220 = vld [vmem:[#allocation2 + $0xa0] sm:$0xff]
    %v221 = vld [vmem:[#allocation2 + $0xa8] sm:$0xff]
    %v222 = vld [vmem:[#allocation2 + $0xb0] sm:$0xff]
    %v223 = vld [vmem:[#allocation2 + $0xb8] sm:$0xff]
    %v224 = vld [vmem:[#allocation2 + $0xc0] sm:$0xff]
    %v225 = vld [vmem:[#allocation2 + $0xc8] sm:$0xff]
    %v226 = vld [vmem:[#allocation2 + $0xd0] sm:$0xff]
    %v227 = vld [vmem:[#allocation2 + $0xd8] sm:$0xff]
    %228 = vrot.lane.b32.xlu0 %v71, 96
    %v229 = vpop.permute.xlu0 %228
    %v230 = vsel %vm72, %v229, 0
    %232 = vmatprep.subr.mxu0 0.0
    %233 = vmatpush1.msra.mxu0 %v224
    %234 = vmatprep.subr.mxu0 0.0
    %235 = vmatpush1.msra.mxu0 %v225
    %236 = vmatprep.subr.mxu0 0.0
    %237 = vmatpush1.msra.mxu0 %v226
    %238 = vmatprep.subr.mxu0 0.0
    %239 = vmatpush1.msra.mxu0 %v227
    %240 = vmatprep.subr.mxu0 0.0
    %241 = vmatpush1.msra.mxu0 0.0
    %242 = vmatprep.subr.mxu0 0.0
    %243 = vmatpush1.msra.mxu0 0.0
    %244 = vmatprep.subr.mxu0 0.0
    %245 = vmatpush1.msra.mxu0 0.0
    %246 = vmatprep.subr.mxu0 0.0
    %247 = vmatpush1.msra.mxu0 0.0
    %248 = vmatprep.subr.mxu0 0.0
    %249 = vmatpush1.msra.mxu0 0.0
    %250 = vmatprep.subr.mxu0 0.0
    %251 = vmatpush1.msra.mxu0 0.0
    %252 = vmatprep.subr.mxu0 0.0
    %253 = vmatpush1.msra.mxu0 0.0
    %254 = vmatprep.subr.mxu0 0.0
    %255 = vmatpush1.msra.mxu0 0.0
    %256 = vmatprep.subr.mxu0 0.0
    %257 = vmatpush1.msra.mxu0 0.0
    %258 = vmatprep.subr.mxu0 0.0
    %259 = vmatpush1.msra.mxu0 0.0
    %260 = vmatprep.subr.mxu0 0.0
    %261 = vmatpush1.msra.mxu0 0.0
    %262 = vmatprep.subr.mxu0 0.0
    %263 = vmatpush1.msra.mxu0 0.0
    %264 = vmatprep.subr.mxu0 0.0
    %265 = vmatpush1.msra.mxu0 0.0
    %266 = vmatprep.subr.mxu0 0.0
    %267 = vmatpush1.msra.mxu0 0.0
    %268 = vmatprep.subr.mxu0 0.0
    %269 = vmatpush1.msra.mxu0 0.0
    %270 = vmatprep.subr.mxu0 0.0
    %271 = vmatpush1.msra.mxu0 0.0
    %272 = vmatprep.subr.mxu0 0.0
    %273 = vmatpush1.msra.mxu0 0.0
    %274 = vmatprep.subr.mxu0 0.0
    %275 = vmatpush1.msra.mxu0 0.0
    %276 = vmatprep.subr.mxu0 0.0
    %277 = vmatpush1.msra.mxu0 0.0
    %278 = vmatprep.subr.mxu0 0.0
    %279 = vmatpush1.msra.mxu0 0.0
    %280 = vmatprep.subr.mxu0 0.0
    %281 = vmatpush1.msra.mxu0 0.0
    %282 = vmatprep.subr.mxu0 0.0
    %283 = vmatpush1.msra.mxu0 0.0
    %284 = vmatprep.subr.mxu0 0.0
    %285 = vmatpush1.msra.mxu0 0.0
    %286 = vmatprep.subr.mxu0 0.0
    %287 = vmatpush1.msra.mxu0 0.0
    %288 = vmatprep.subr.mxu0 0.0
    %289 = vmatpush1.msra.mxu0 0.0
    %290 = vmatprep.subr.mxu0 0.0
    %291 = vmatpush1.msra.mxu0 0.0
    %292 = vmatprep.subr.mxu0 0.0
    %293 = vmatpush1.msra.mxu0 0.0
    %294 = vmatprep.subr.mxu0 0.0
    %295 = vmatpush1.msra.mxu0 0.0
    %296 = vmatprep.mubr.f32.mxu0 0.0
    %297 = vmatmul.mubr.f32.gmra.mrb[0].mxu0 %v230
    %v298 = vpop.f32.mrb[0].mxu0
    %v299 = vadd.f32 0.0, %v298
    %v300 = vpop.f32.mrb[0].mxu0
    %301 = vdwg.mxu0
    %v303 = vsel %vm72, %v219, 0
    %305 = vmatprep.subr.mxu0 0.0
    %306 = vmatpush1.msra.mxu0 %v220
    %307 = vmatprep.subr.mxu0 0.0
    %308 = vmatpush1.msra.mxu0 %v221
    %309 = vmatprep.subr.mxu0 0.0
    %310 = vmatpush1.msra.mxu0 %v222
    %311 = vmatprep.subr.mxu0 0.0
    %312 = vmatpush1.msra.mxu0 %v223
    %313 = vmatprep.subr.mxu0 0.0
    %314 = vmatpush1.msra.mxu0 0.0
    %315 = vmatprep.subr.mxu0 0.0
    %316 = vmatpush1.msra.mxu0 0.0
    %317 = vmatprep.subr.mxu0 0.0
    %318 = vmatpush1.msra.mxu0 0.0
    %319 = vmatprep.subr.mxu0 0.0
    %320 = vmatpush1.msra.mxu0 0.0
    %321 = vmatprep.subr.mxu0 0.0
    %322 = vmatpush1.msra.mxu0 0.0
    %323 = vmatprep.subr.mxu0 0.0
    %324 = vmatpush1.msra.mxu0 0.0
    %325 = vmatprep.subr.mxu0 0.0
    %326 = vmatpush1.msra.mxu0 0.0
    %327 = vmatprep.subr.mxu0 0.0
    %328 = vmatpush1.msra.mxu0 0.0
    %329 = vmatprep.subr.mxu0 0.0
    %330 = vmatpush1.msra.mxu0 0.0
    %331 = vmatprep.subr.mxu0 0.0
    %332 = vmatpush1.msra.mxu0 0.0
    %333 = vmatprep.subr.mxu0 0.0
    %334 = vmatpush1.msra.mxu0 0.0
    %335 = vmatprep.subr.mxu0 0.0
    %336 = vmatpush1.msra.mxu0 0.0
    %337 = vmatprep.subr.mxu0 0.0
    %338 = vmatpush1.msra.mxu0 0.0
    %339 = vmatprep.subr.mxu0 0.0
    %340 = vmatpush1.msra.mxu0 0.0
    %341 = vmatprep.subr.mxu0 0.0
    %342 = vmatpush1.msra.mxu0 0.0
    %343 = vmatprep.subr.mxu0 0.0
    %344 = vmatpush1.msra.mxu0 0.0
    %345 = vmatprep.subr.mxu0 0.0
    %346 = vmatpush1.msra.mxu0 0.0
    %347 = vmatprep.subr.mxu0 0.0
    %348 = vmatpush1.msra.mxu0 0.0
    %349 = vmatprep.subr.mxu0 0.0
    %350 = vmatpush1.msra.mxu0 0.0
    %351 = vmatprep.subr.mxu0 0.0
    %352 = vmatpush1.msra.mxu0 0.0
    %353 = vmatprep.subr.mxu0 0.0
    %354 = vmatpush1.msra.mxu0 0.0
    %355 = vmatprep.subr.mxu0 0.0
    %356 = vmatpush1.msra.mxu0 0.0
    %357 = vmatprep.subr.mxu0 0.0
    %358 = vmatpush1.msra.mxu0 0.0
    %359 = vmatprep.subr.mxu0 0.0
    %360 = vmatpush1.msra.mxu0 0.0
    %361 = vmatprep.subr.mxu0 0.0
    %362 = vmatpush1.msra.mxu0 0.0
    %363 = vmatprep.subr.mxu0 0.0
    %364 = vmatpush1.msra.mxu0 0.0
    %365 = vmatprep.subr.mxu0 0.0
    %366 = vmatpush1.msra.mxu0 0.0
    %367 = vmatprep.subr.mxu0 0.0
    %368 = vmatpush1.msra.mxu0 0.0
    %369 = vmatprep.mubr.f32.mxu0 0.0
    %370 = vmatmul.mubr.f32.gmra.mrb[0].mxu0 %v303
    %v371 = vpop.f32.mrb[0].mxu0
    %v372 = vadd.f32 %v299, %v371
    %v373 = vpop.f32.mrb[0].mxu0
    %374 = vdwg.mxu0
    %v375 = vlaneseq
    %v376 = vshrl.u32 %v375, 7
    %v377 = vsub.s32 1, %v376
    %v378 = vrot.slane %v41, %v377
    %v379 = vadd.f32 %v372, %v378
    %v380 = vxor.u32 %v379, 2147483648
    %v381 = vmul.f32 %v380, 1.442695
    %v382 = vpow.pop %v381
    %v383 = vadd.f32 %v382, 1.0
    %v384 = vrcp.pop %v383
    %v385 = vmul.f32 1.0, %v384
    %v386 = vtanh.pop %v379
    %v388 = vmul.f32 %v385, %v229
    %390 = vrot.lane.b32.xlu0 %v386, 64
    %v391 = vpop.permute.xlu0 %390
    %v393 = vmul.f32 %v385, %v391
    %395 = vrot.lane.b32.xlu0 %v393, 32
    %v396 = vpop.permute.xlu0 %395
    %v398 = vadd.f32 %v388, %v396
    %v399 = vtanh.pop %v398
    %401 = vrot.lane.b32.xlu0 %v399, 64
    %v402 = vpop.permute.xlu0 %401
    %v404 = vmul.f32 %v385, %v402
    %v405 = vld [vmem:[#allocation2 + $0xe0] sm:$0xff]
    %v406 = vld [vmem:[#allocation2 + $0xe8] sm:$0xff]
    %v407 = vld [vmem:[#allocation2 + $0xf0] sm:$0xff]
    %v408 = vld [vmem:[#allocation2 + $0xf8] sm:$0xff]
    %v409 = vld [vmem:[#allocation2 + $0x100] sm:$0xff]
    %v410 = vld [vmem:[#allocation2 + $0x108] sm:$0xff]
    %v411 = vld [vmem:[#allocation2 + $0x110] sm:$0xff]
    %v412 = vld [vmem:[#allocation2 + $0x118] sm:$0xff]
    %414 = vrot.lane.b32.xlu0 %v398, 96
    %v415 = vpop.permute.xlu0 %414
    %v416 = vsel %vm72, %v415, 0
    %418 = vmatprep.subr.mxu0 0.0
    %419 = vmatpush1.msra.mxu0 %v409
    %420 = vmatprep.subr.mxu0 0.0
    %421 = vmatpush1.msra.mxu0 %v410
    %422 = vmatprep.subr.mxu0 0.0
    %423 = vmatpush1.msra.mxu0 %v411
    %424 = vmatprep.subr.mxu0 0.0
    %425 = vmatpush1.msra.mxu0 %v412
    %426 = vmatprep.subr.mxu0 0.0
    %427 = vmatpush1.msra.mxu0 0.0
    %428 = vmatprep.subr.mxu0 0.0
    %429 = vmatpush1.msra.mxu0 0.0
    %430 = vmatprep.subr.mxu0 0.0
    %431 = vmatpush1.msra.mxu0 0.0
    %432 = vmatprep.subr.mxu0 0.0
    %433 = vmatpush1.msra.mxu0 0.0
    %434 = vmatprep.subr.mxu0 0.0
    %435 = vmatpush1.msra.mxu0 0.0
    %436 = vmatprep.subr.mxu0 0.0
    %437 = vmatpush1.msra.mxu0 0.0
    %438 = vmatprep.subr.mxu0 0.0
    %439 = vmatpush1.msra.mxu0 0.0
    %440 = vmatprep.subr.mxu0 0.0
    %441 = vmatpush1.msra.mxu0 0.0
    %442 = vmatprep.subr.mxu0 0.0
    %443 = vmatpush1.msra.mxu0 0.0
    %444 = vmatprep.subr.mxu0 0.0
    %445 = vmatpush1.msra.mxu0 0.0
    %446 = vmatprep.subr.mxu0 0.0
    %447 = vmatpush1.msra.mxu0 0.0
    %448 = vmatprep.subr.mxu0 0.0
    %449 = vmatpush1.msra.mxu0 0.0
    %450 = vmatprep.subr.mxu0 0.0
    %451 = vmatpush1.msra.mxu0 0.0
    %452 = vmatprep.subr.mxu0 0.0
    %453 = vmatpush1.msra.mxu0 0.0
    %454 = vmatprep.subr.mxu0 0.0
    %455 = vmatpush1.msra.mxu0 0.0
    %456 = vmatprep.subr.mxu0 0.0
    %457 = vmatpush1.msra.mxu0 0.0
    %458 = vmatprep.subr.mxu0 0.0
    %459 = vmatpush1.msra.mxu0 0.0
    %460 = vmatprep.subr.mxu0 0.0
    %461 = vmatpush1.msra.mxu0 0.0
    %462 = vmatprep.subr.mxu0 0.0
    %463 = vmatpush1.msra.mxu0 0.0
    %464 = vmatprep.subr.mxu0 0.0
    %465 = vmatpush1.msra.mxu0 0.0
    %466 = vmatprep.subr.mxu0 0.0
    %467 = vmatpush1.msra.mxu0 0.0
    %468 = vmatprep.subr.mxu0 0.0
    %469 = vmatpush1.msra.mxu0 0.0
    %470 = vmatprep.subr.mxu0 0.0
    %471 = vmatpush1.msra.mxu0 0.0
    %472 = vmatprep.subr.mxu0 0.0
    %473 = vmatpush1.msra.mxu0 0.0
    %474 = vmatprep.subr.mxu0 0.0
    %475 = vmatpush1.msra.mxu0 0.0
    %476 = vmatprep.subr.mxu0 0.0
    %477 = vmatpush1.msra.mxu0 0.0
    %478 = vmatprep.subr.mxu0 0.0
    %479 = vmatpush1.msra.mxu0 0.0
    %480 = vmatprep.subr.mxu0 0.0
    %481 = vmatpush1.msra.mxu0 0.0
    %482 = vmatprep.mubr.f32.mxu0 0.0
    %483 = vmatmul.mubr.f32.gmra.mrb[0].mxu0 %v416
    %v484 = vpop.f32.mrb[0].mxu0
    %v485 = vadd.f32 0.0, %v484
    %v486 = vpop.f32.mrb[0].mxu0
    %487 = vdwg.mxu0
    %489 = vrot.lane.b32.xlu0 %v404, 32
    %v490 = vpop.permute.xlu0 %489
    %v491 = vsel %vm72, %v490, 0
    %493 = vmatprep.subr.mxu0 0.0
    %494 = vmatpush1.msra.mxu0 %v405
    %495 = vmatprep.subr.mxu0 0.0
    %496 = vmatpush1.msra.mxu0 %v406
    %497 = vmatprep.subr.mxu0 0.0
    %498 = vmatpush1.msra.mxu0 %v407
    %499 = vmatprep.subr.mxu0 0.0
    %500 = vmatpush1.msra.mxu0 %v408
    %501 = vmatprep.subr.mxu0 0.0
    %502 = vmatpush1.msra.mxu0 0.0
    %503 = vmatprep.subr.mxu0 0.0
    %504 = vmatpush1.msra.mxu0 0.0
    %505 = vmatprep.subr.mxu0 0.0
    %506 = vmatpush1.msra.mxu0 0.0
    %507 = vmatprep.subr.mxu0 0.0
    %508 = vmatpush1.msra.mxu0 0.0
    %509 = vmatprep.subr.mxu0 0.0
    %510 = vmatpush1.msra.mxu0 0.0
    %511 = vmatprep.subr.mxu0 0.0
    %512 = vmatpush1.msra.mxu0 0.0
    %513 = vmatprep.subr.mxu0 0.0
    %514 = vmatpush1.msra.mxu0 0.0
    %515 = vmatprep.subr.mxu0 0.0
    %516 = vmatpush1.msra.mxu0 0.0
    %517 = vmatprep.subr.mxu0 0.0
    %518 = vmatpush1.msra.mxu0 0.0
    %519 = vmatprep.subr.mxu0 0.0
    %520 = vmatpush1.msra.mxu0 0.0
    %521 = vmatprep.subr.mxu0 0.0
    %522 = vmatpush1.msra.mxu0 0.0
    %523 = vmatprep.subr.mxu0 0.0
    %524 = vmatpush1.msra.mxu0 0.0
    %525 = vmatprep.subr.mxu0 0.0
    %526 = vmatpush1.msra.mxu0 0.0
    %527 = vmatprep.subr.mxu0 0.0
    %528 = vmatpush1.msra.mxu0 0.0
    %529 = vmatprep.subr.mxu0 0.0
    %530 = vmatpush1.msra.mxu0 0.0
    %531 = vmatprep.subr.mxu0 0.0
    %532 = vmatpush1.msra.mxu0 0.0
    %533 = vmatprep.subr.mxu0 0.0
    %534 = vmatpush1.msra.mxu0 0.0
    %535 = vmatprep.subr.mxu0 0.0
    %536 = vmatpush1.msra.mxu0 0.0
    %537 = vmatprep.subr.mxu0 0.0
    %538 = vmatpush1.msra.mxu0 0.0
    %539 = vmatprep.subr.mxu0 0.0
    %540 = vmatpush1.msra.mxu0 0.0
    %541 = vmatprep.subr.mxu0 0.0
    %542 = vmatpush1.msra.mxu0 0.0
    %543 = vmatprep.subr.mxu0 0.0
    %544 = vmatpush1.msra.mxu0 0.0
    %545 = vmatprep.subr.mxu0 0.0
    %546 = vmatpush1.msra.mxu0 0.0
    %547 = vmatprep.subr.mxu0 0.0
    %548 = vmatpush1.msra.mxu0 0.0
    %549 = vmatprep.subr.mxu0 0.0
    %550 = vmatpush1.msra.mxu0 0.0
    %551 = vmatprep.subr.mxu0 0.0
    %552 = vmatpush1.msra.mxu0 0.0
    %553 = vmatprep.subr.mxu0 0.0
    %554 = vmatpush1.msra.mxu0 0.0
    %555 = vmatprep.subr.mxu0 0.0
    %556 = vmatpush1.msra.mxu0 0.0
    %557 = vmatprep.mubr.f32.mxu0 0.0
    %558 = vmatmul.mubr.f32.gmra.mrb[0].mxu0 %v491
    %v559 = vpop.f32.mrb[0].mxu0
    %v560 = vadd.f32 %v485, %v559
    %v561 = vpop.f32.mrb[0].mxu0
    %562 = vdwg.mxu0
    %v563 = vlaneseq
    %v564 = vshrl.u32 %v563, 7
    %v565 = vsub.s32 2, %v564
    %v566 = vrot.slane %v41, %v565
    %v567 = vadd.f32 %v560, %v566
    %v569 = vrot.slane %v567, 6
    %vm571 = vcmask 1041408
    %v572 = vsel %vm571, %v567, %v569
    %v573 = vld [vmem:[%s3] sm:$0x3]
    %v575 = vrot.slane %v573, 6
    %v577 = vsel %vm571, %v573, %v575
    %v578 = vld [vmem:[%s2] sm:$0xff]
    %v579 = vld [vmem:[%s2 + $0x8] sm:$0xff]
    %v580 = vld [vmem:[%s2 + $0x10] sm:$0xff]
    %v581 = vld [vmem:[%s2 + $0x18] sm:$0xff]
    %v584 = vunpack.c.l.s4 1966171168
    %v585 = vunpack.c.0.s8 %v584
    %v586 = vlaneseq
    %v587 = vshrl.u32 %v586, 7
    %v588 = vsub.s32 %v585, %v587
    %v589 = vrot.slane %v572, %v588
    %v590 = vcombine.high %v589, %v589
    %v592 = vunpack.c.l.s4 1966171168
    %v593 = vunpack.c.0.s8 %v592
    %v594 = vlaneseq
    %v595 = vshrl.u32 %v594, 7
    %v596 = vsub.s32 %v593, %v595
    %v597 = vrot.slane %v589, %v596
    %v599 = vunpack.c.l.s4 1966171168
    %v600 = vunpack.c.0.s8 %v599
    %v601 = vlaneseq
    %v602 = vshrl.u32 %v601, 7
    %v603 = vsub.s32 %v600, %v602
    %v604 = vrot.slane %v590, %v603
    %v605 = vcombine.high %v597, %v597
    %v606 = vcombine.high %v604, %v604
    %v607 = vlaneseq
    %v608 = vshrl.u32 %v607, 7
    %v609 = vsub.s32 0, %v608
    %v610 = vrot.slane %v597, %v609
    %v611 = vlaneseq
    %v612 = vshrl.u32 %v611, 7
    %v613 = vsub.s32 0, %v612
    %v614 = vrot.slane %v604, %v613
    %v615 = vlaneseq
    %v616 = vshrl.u32 %v615, 7
    %v617 = vsub.s32 0, %v616
    %v618 = vrot.slane %v605, %v617
    %v619 = vlaneseq
    %v620 = vshrl.u32 %v619, 7
    %v621 = vsub.s32 0, %v620
    %v622 = vrot.slane %v606, %v621
    %v627 = vadd.f32 %v578, %v610
    %v628 = vadd.f32 %v579, %v614
    %v629 = vadd.f32 %v580, %v618
    %v630 = vadd.f32 %v581, %v622
    %v631 = vtanh.pop %v627
    %v632 = vtanh.pop %v628
    %v633 = vtanh.pop %v629
    %v634 = vtanh.pop %v630
    %v635 = vlaneseq
    %v636 = vshrl.u32 %v635, 7
    %v637 = vsub.s32 5, %v636
    %v638 = vrot.slane %v41, %v637
    %v639 = vmul.f32 %v631, %v638
    %v640 = vmul.f32 %v632, %v638
    %v641 = vmul.f32 %v633, %v638
    %v642 = vmul.f32 %v634, %v638
    %vm643 = vcmask 523264
    %v644 = vsel %vm643, %v639, 0.0
    %645 = vadd.xlane.f32.xlu0 %v644
    %v646 = vpop.xlane.xlu0 %645
    %v647 = vsel %vm643, %v640, 0.0
    %648 = vadd.xlane.f32.xlu0 %v647
    %v649 = vpop.xlane.xlu0 %648
    %v650 = vsel %vm643, %v641, 0.0
    %651 = vadd.xlane.f32.xlu0 %v650
    %v652 = vpop.xlane.xlu0 %651
    %v653 = vsel %vm643, %v642, 0.0
    %654 = vadd.xlane.f32.xlu0 %v653
    %v655 = vpop.xlane.xlu0 %654
    %v656 = vsub.f32 %v577, 1.0
    %v657 = vmul.f32 %v656, 1e+09
    %v659 = vlaneseq
    %v660 = vshrl.u32 %v659, 7
    %v661 = vsub.s32 0, %v660
    %v662 = vrot.slane %v657, %v661
    %664 = vbcast.lane.b32.xlu0 %v662, 256
    %v665 = vpop.permute.xlu0 %664
    %v666 = vlaneseq
    %v667 = vshrl.u32 %v666, 7
    %v668 = vsub.s32 1, %v667
    %v669 = vrot.slane %v657, %v668
    %671 = vbcast.lane.b32.xlu0 %v669, 256
    %v672 = vpop.permute.xlu0 %671
    %v673 = vlaneseq
    %v674 = vshrl.u32 %v673, 7
    %v675 = vsub.s32 2, %v674
    %v676 = vrot.slane %v657, %v675
    %678 = vbcast.lane.b32.xlu0 %v676, 256
    %v679 = vpop.permute.xlu0 %678
    %v680 = vlaneseq
    %v681 = vshrl.u32 %v680, 7
    %v682 = vsub.s32 3, %v681
    %v683 = vrot.slane %v657, %v682
    %685 = vbcast.lane.b32.xlu0 %v683, 256
    %v686 = vpop.permute.xlu0 %685
    %v691 = vadd.f32 %v646, %v665
    %v692 = vadd.f32 %v649, %v672
    %v693 = vadd.f32 %v652, %v679
    %v694 = vadd.f32 %v655, %v686
    %699 = vset.pattern.permute.xlu0 0
    %700 = vperm.xlu0 %699, %v691
    %v701 = vpop.permute.xlu0 %700
    %702 = vset.pattern.permute.xlu0 0
    %703 = vperm.xlu0 %702, %v692
    %v704 = vpop.permute.xlu0 %703
    %705 = vset.pattern.permute.xlu0 0
    %706 = vperm.xlu0 %705, %v693
    %v707 = vpop.permute.xlu0 %706
    %708 = vset.pattern.permute.xlu0 0
    %709 = vperm.xlu0 %708, %v694
    %v710 = vpop.permute.xlu0 %709
    %v711 = vlaneseq
    %v712 = vand.u32 %v711, 127
    %v713 = vlaneseq
    %v714 = vshrl.u32 %v713, 7
    %v715 = vsub.s32 %v712, %v714
    %v716 = vrot.slane %v701, %v715
    %v717 = vlaneseq
    %v718 = vshrl.u32 %v717, 7
    %v719 = vsub.s32 %v712, %v718
    %v720 = vrot.slane %v704, %v719
    %v721 = vlaneseq
    %v722 = vshrl.u32 %v721, 7
    %v723 = vsub.s32 %v712, %v722
    %v724 = vrot.slane %v707, %v723
    %v725 = vlaneseq
    %v726 = vshrl.u32 %v725, 7
    %v727 = vsub.s32 %v712, %v726
    %v728 = vrot.slane %v710, %v727
    %vm729 = vcmask 1041409
    %v730 = vsel %vm729, %v720, %v716
    %vm731 = vcmask 1042434
    %v732 = vsel %vm731, %v724, %v730
    %vm733 = vcmask 1043459
    %v734 = vsel %vm733, %v728, %v732
    %vm736 = vcmask 60416
    %v737 = vsel %vm736, %v734, -inf
    %738 = vmax.xlane.f32.xlu0 %v737
    %v739 = vpop.xlane.xlu0 %738
    %v741 = vlaneseq
    %v742 = vshrl.u32 %v741, 7
    %v743 = vsub.s32 0, %v742
    %v744 = vrot.slane %v739, %v743
    %v745 = vlaneseq
    %v746 = vshrl.u32 %v745, 7
    %v747 = vsub.s32 1, %v746
    %v748 = vrot.slane %v739, %v747
    %v749 = vlaneseq
    %v750 = vshrl.u32 %v749, 7
    %v751 = vsub.s32 2, %v750
    %v752 = vrot.slane %v739, %v751
    %v753 = vlaneseq
    %v754 = vshrl.u32 %v753, 7
    %v755 = vsub.s32 3, %v754
    %v756 = vrot.slane %v739, %v755
    %v761 = vsub.f32 %v691, %v744
    %v762 = vsub.f32 %v692, %v748
    %v763 = vsub.f32 %v693, %v752
    %v764 = vsub.f32 %v694, %v756
    %v765 = vmul.f32 %v761, 1.442695
    %v766 = vpow.pop %v765
    %v767 = vmul.f32 %v762, 1.442695
    %v768 = vpow.pop %v767
    %v769 = vmul.f32 %v763, 1.442695
    %v770 = vpow.pop %v769
    %v771 = vmul.f32 %v764, 1.442695
    %v772 = vpow.pop %v771
    %777 = vset.pattern.permute.xlu0 0
    %778 = vperm.xlu0 %777, %v766
    %v779 = vpop.permute.xlu0 %778
    %780 = vset.pattern.permute.xlu0 0
    %781 = vperm.xlu0 %780, %v768
    %v782 = vpop.permute.xlu0 %781
    %783 = vset.pattern.permute.xlu0 0
    %784 = vperm.xlu0 %783, %v770
    %v785 = vpop.permute.xlu0 %784
    %786 = vset.pattern.permute.xlu0 0
    %787 = vperm.xlu0 %786, %v772
    %v788 = vpop.permute.xlu0 %787
    %v789 = vlaneseq
    %v790 = vshrl.u32 %v789, 7
    %v791 = vsub.s32 %v712, %v790
    %v792 = vrot.slane %v779, %v791
    %v793 = vlaneseq
    %v794 = vshrl.u32 %v793, 7
    %v795 = vsub.s32 %v712, %v794
    %v796 = vrot.slane %v782, %v795
    %v797 = vlaneseq
    %v798 = vshrl.u32 %v797, 7
    %v799 = vsub.s32 %v712, %v798
    %v800 = vrot.slane %v785, %v799
    %v801 = vlaneseq
    %v802 = vshrl.u32 %v801, 7
    %v803 = vsub.s32 %v712, %v802
    %v804 = vrot.slane %v788, %v803
    %v805 = vsel %vm729, %v796, %v792
    %v806 = vsel %vm731, %v800, %v805
    %v807 = vsel %vm733, %v804, %v806
    %v809 = vsel %vm736, %v807, 0.0
    %810 = vadd.xlane.f32.xlu0 %v809
    %v811 = vpop.xlane.xlu0 %810
    %v812 = vrcp.pop %v811
    %v814 = vlaneseq
    %v815 = vshrl.u32 %v814, 7
    %v816 = vsub.s32 0, %v815
    %v817 = vrot.slane %v812, %v816
    %v818 = vlaneseq
    %v819 = vshrl.u32 %v818, 7
    %v820 = vsub.s32 1, %v819
    %v821 = vrot.slane %v812, %v820
    %v822 = vlaneseq
    %v823 = vshrl.u32 %v822, 7
    %v824 = vsub.s32 2, %v823
    %v825 = vrot.slane %v812, %v824
    %v826 = vlaneseq
    %v827 = vshrl.u32 %v826, 7
    %v828 = vsub.s32 3, %v827
    %v829 = vrot.slane %v812, %v828
    %v834 = vmul.f32 %v766, %v817
    %v835 = vmul.f32 %v768, %v821
    %v836 = vmul.f32 %v770, %v825
    %v837 = vmul.f32 %v772, %v829
    %v838 = vld [vmem:[%s1] sm:$0xff]
    %v839 = vld [vmem:[%s1 + $0x8] sm:$0xff]
    %v840 = vld [vmem:[%s1 + $0x10] sm:$0xff]
    %v841 = vld [vmem:[%s1 + $0x18] sm:$0xff]
    %843 = vset.pattern.permute.xlu0 0
    %844 = vperm.xlu0 %843, %v834
    %v845 = vpop.permute.xlu0 %844
    %848 = vset.pattern.permute.xlu0 0
    %849 = vperm.xlu0 %848, %v835
    %v850 = vpop.permute.xlu0 %849
    %853 = vset.pattern.permute.xlu0 0
    %854 = vperm.xlu0 %853, %v836
    %v855 = vpop.permute.xlu0 %854
    %858 = vset.pattern.permute.xlu0 0
    %859 = vperm.xlu0 %858, %v837
    %v860 = vpop.permute.xlu0 %859
    %v862 = vmul.f32 %v845, %v838
    %v863 = vmul.f32 %v850, %v839
    %v864 = vmul.f32 %v855, %v840
    %v865 = vmul.f32 %v860, %v841
    %v866 = vsel %vm643, %v862, 0.0
    %v867 = vrot.slane %v866, 4
    %v868 = vadd.f32 %v866, %v867
    %v869 = vrot.slane %v868, 2
    %v870 = vadd.f32 %v868, %v869
    %v871 = vrot.slane %v870, 1
    %v872 = vadd.f32 %v870, %v871
    %v873 = vsel %vm643, %v863, 0.0
    %v874 = vrot.slane %v873, 4
    %v875 = vadd.f32 %v873, %v874
    %v876 = vrot.slane %v875, 2
    %v877 = vadd.f32 %v875, %v876
    %v878 = vrot.slane %v877, 1
    %v879 = vadd.f32 %v877, %v878
    %v880 = vsel %vm643, %v864, 0.0
    %v881 = vrot.slane %v880, 4
    %v882 = vadd.f32 %v880, %v881
    %v883 = vrot.slane %v882, 2
    %v884 = vadd.f32 %v882, %v883
    %v885 = vrot.slane %v884, 1
    %v886 = vadd.f32 %v884, %v885
    %v887 = vsel %vm643, %v865, 0.0
    %v888 = vrot.slane %v887, 4
    %v889 = vadd.f32 %v887, %v888
    %v890 = vrot.slane %v889, 2
    %v891 = vadd.f32 %v889, %v890
    %v892 = vrot.slane %v891, 1
    %v893 = vadd.f32 %v891, %v892
    %v896 = vsel %vm729, %v879, %v872
    %v900 = vsel %vm729, %v893, %v886
    %901 = vrot.lane.b32.xlu0 %v900, 64
    %v902 = vpop.permute.xlu0 %901
    %v904 = vsel %vm643, %v896, %v902
    %v905 = vadd.f32 %v834, %v836
    %v906 = vadd.f32 %v835, %v837
    %909 = vset.pattern.permute.xlu0 0
    %910 = vperm.xlu0 %909, %v905
    %v911 = vpop.permute.xlu0 %910
    %912 = vset.pattern.permute.xlu0 0
    %913 = vperm.xlu0 %912, %v906
    %v914 = vpop.permute.xlu0 %913
    %v915 = vlaneseq
    %v916 = vshrl.u32 %v915, 7
    %v917 = vsub.s32 %v712, %v916
    %v918 = vrot.slane %v911, %v917
    %v919 = vlaneseq
    %v920 = vshrl.u32 %v919, 7
    %v921 = vsub.s32 %v712, %v920
    %v922 = vrot.slane %v914, %v921
    %v923 = vsel %vm729, %v922, %v918
    %vm925 = vcmask 58368
    %v926 = vsel %vm925, %v923, 0.0
    %927 = vadd.xlane.f32.xlu0 %v926
    %v928 = vpop.xlane.xlu0 %927
    %v930 = vlaneseq
    %v931 = vshrl.u32 %v930, 7
    %v932 = vsub.s32 0, %v931
    %v933 = vrot.slane %v928, %v932
    %v934 = vlaneseq
    %v935 = vshrl.u32 %v934, 7
    %v936 = vsub.s32 1, %v935
    %v937 = vrot.slane %v928, %v936
    %v940 = vrcp.pop %v933
    %v941 = vmul.f32 %v905, %v940
    %v942 = vrcp.pop %v937
    %v943 = vmul.f32 %v906, %v942
    %v944 = vlaneseq
    %v945 = vshrl.u32 %v944, 7
    %v946 = vsub.s32 6, %v945
    %v947 = vrot.slane %v41, %v946
    %v948 = vmul.f32 %v904, %v947
    %v949 = vsel %vm571, %v948, 0.0
    %950 = vadd.xlane.f32.xlu0 %v949
    %v951 = vpop.xlane.xlu0 %950
    %v952 = vlaneseq
    %v953 = vshrl.u32 %v952, 7
    %v954 = vsub.s32 7, %v953
    %v955 = vrot.slane %v41, %v954
    %957 = vrot.lane.b32.xlu0 %v955, 96
    %v958 = vpop.permute.xlu0 %957
    %v960 = vmul.f32 %v404, %v958
    %962 = vrot.lane.b32.xlu0 %v960, 32
    %v963 = vpop.permute.xlu0 %962
    %vm965 = vcmask 254976
    %v966 = vsel %vm965, %v963, 0.0
    %967 = vadd.xlane.f32.xlu0 %v966
    %v968 = vpop.xlane.xlu0 %967
    %v969 = vadd.f32 %v951, %v968
    %v970 = vlaneseq
    %v971 = vshrl.u32 %v970, 7
    %v972 = vsub.s32 0, %v971
    %v973 = vrot.slane %v42, %v972
    %975 = vrot.lane.b32.xlu0 %v973, 32
    %v976 = vpop.permute.xlu0 %975
    %v978 = vmul.f32 %v398, %v976
    %980 = vrot.lane.b32.xlu0 %v978, 96
    %v981 = vpop.permute.xlu0 %980
    %v983 = vsel %vm965, %v981, 0.0
    %984 = vadd.xlane.f32.xlu0 %v983
    %v985 = vpop.xlane.xlu0 %984
    %v986 = vadd.f32 %v969, %v985
    %v987 = vlaneseq
    %v988 = vshrl.u32 %v987, 7
    %v989 = vsub.s32 1, %v988
    %v990 = vrot.slane %v42, %v989
    %v991 = vmul.f32 %v219, %v990
    %v992 = vsel %vm965, %v991, 0.0
    %993 = vadd.xlane.f32.xlu0 %v992
    %v994 = vpop.xlane.xlu0 %993
    %v995 = vadd.f32 %v986, %v994
    %v996 = vlaneseq
    %v997 = vshrl.u32 %v996, 7
    %v998 = vsub.s32 2, %v997
    %v999 = vrot.slane %v42, %v998
    %v1000 = vadd.f32 %v995, %v999
    %v1001 = vxor.u32 %v1000, 2147483648
    %v1002 = vmul.f32 %v1001, 1.442695
    %v1003 = vpow.pop %v1002
    %v1004 = vadd.f32 %v1003, 1.0
    %v1005 = vrcp.pop %v1004
    %v1006 = vmul.f32 1.0, %v1005
    %v1007 = vld [vmem:[#allocation2 + $0x120] sm:$0xff]
    %v1008 = vld [vmem:[#allocation2 + $0x128] sm:$0xff]
    %v1009 = vld [vmem:[#allocation2 + $0x130] sm:$0xff]
    %v1010 = vld [vmem:[#allocation2 + $0x138] sm:$0xff]
    %v1011 = vld [vmem:[#allocation2 + $0x140] sm:$0xff]
    %v1012 = vld [vmem:[#allocation2 + $0x148] sm:$0xff]
    %v1013 = vld [vmem:[#allocation2 + $0x150] sm:$0xff]
    %v1014 = vld [vmem:[#allocation2 + $0x158] sm:$0xff]
    %v1015 = vld [vmem:[#allocation2 + $0x160] sm:$0xff]
    %v1016 = vld [vmem:[#allocation2 + $0x168] sm:$0xff]
    %v1017 = vld [vmem:[#allocation2 + $0x170] sm:$0xff]
    %v1018 = vld [vmem:[#allocation2 + $0x178] sm:$0xff]
    %v1019 = vld [vmem:[#allocation2 + $0x180] sm:$0xff]
    %v1020 = vld [vmem:[#allocation2 + $0x188] sm:$0xff]
    %v1021 = vld [vmem:[#allocation2 + $0x190] sm:$0xff]
    %v1022 = vld [vmem:[#allocation2 + $0x198] sm:$0xff]
    %v1023 = vld [vmem:[#allocation2 + $0x1a0] sm:$0xff]
    %v1024 = vld [vmem:[#allocation2 + $0x1a8] sm:$0xff]
    %v1025 = vld [vmem:[#allocation2 + $0x1b0] sm:$0xff]
    %v1026 = vld [vmem:[#allocation2 + $0x1b8] sm:$0xff]
    %1027 = vmatprep.subr.mxu0 0.0
    %1028 = vmatpush1.msra.mxu0 %v1011
    %1029 = vmatprep.subr.mxu0 0.0
    %1030 = vmatpush1.msra.mxu0 %v1012
    %1031 = vmatprep.subr.mxu0 0.0
    %1032 = vmatpush1.msra.mxu0 %v1013
    %1033 = vmatprep.subr.mxu0 0.0
    %1034 = vmatpush1.msra.mxu0 %v1014
    %1035 = vmatprep.subr.mxu0 0.0
    %1036 = vmatpush1.msra.mxu0 %v1015
    %1037 = vmatprep.subr.mxu0 0.0
    %1038 = vmatpush1.msra.mxu0 %v1016
    %1039 = vmatprep.subr.mxu0 0.0
    %1040 = vmatpush1.msra.mxu0 %v1017
    %1041 = vmatprep.subr.mxu0 0.0
    %1042 = vmatpush1.msra.mxu0 %v1018
    %1043 = vmatprep.subr.mxu0 0.0
    %1044 = vmatpush1.msra.mxu0 %v1019
    %1045 = vmatprep.subr.mxu0 0.0
    %1046 = vmatpush1.msra.mxu0 %v1020
    %1047 = vmatprep.subr.mxu0 0.0
    %1048 = vmatpush1.msra.mxu0 %v1021
    %1049 = vmatprep.subr.mxu0 0.0
    %1050 = vmatpush1.msra.mxu0 %v1022
    %1051 = vmatprep.subr.mxu0 0.0
    %1052 = vmatpush1.msra.mxu0 %v1023
    %1053 = vmatprep.subr.mxu0 0.0
    %1054 = vmatpush1.msra.mxu0 %v1024
    %1055 = vmatprep.subr.mxu0 0.0
    %1056 = vmatpush1.msra.mxu0 %v1025
    %1057 = vmatprep.subr.mxu0 0.0
    %1058 = vmatpush1.msra.mxu0 %v1026
    %1059 = vmatprep.subr.mxu0 0.0
    %1060 = vmatpush1.msra.mxu0 0.0
    %1061 = vmatprep.subr.mxu0 0.0
    %1062 = vmatpush1.msra.mxu0 0.0
    %1063 = vmatprep.subr.mxu0 0.0
    %1064 = vmatpush1.msra.mxu0 0.0
    %1065 = vmatprep.subr.mxu0 0.0
    %1066 = vmatpush1.msra.mxu0 0.0
    %1067 = vmatprep.subr.mxu0 0.0
    %1068 = vmatpush1.msra.mxu0 0.0
    %1069 = vmatprep.subr.mxu0 0.0
    %1070 = vmatpush1.msra.mxu0 0.0
    %1071 = vmatprep.subr.mxu0 0.0
    %1072 = vmatpush1.msra.mxu0 0.0
    %1073 = vmatprep.subr.mxu0 0.0
    %1074 = vmatpush1.msra.mxu0 0.0
    %1075 = vmatprep.subr.mxu0 0.0
    %1076 = vmatpush1.msra.mxu0 0.0
    %1077 = vmatprep.subr.mxu0 0.0
    %1078 = vmatpush1.msra.mxu0 0.0
    %1079 = vmatprep.subr.mxu0 0.0
    %1080 = vmatpush1.msra.mxu0 0.0
    %1081 = vmatprep.subr.mxu0 0.0
    %1082 = vmatpush1.msra.mxu0 0.0
    %1083 = vmatprep.subr.mxu0 0.0
    %1084 = vmatpush1.msra.mxu0 0.0
    %1085 = vmatprep.subr.mxu0 0.0
    %1086 = vmatpush1.msra.mxu0 0.0
    %1087 = vmatprep.subr.mxu0 0.0
    %1088 = vmatpush1.msra.mxu0 0.0
    %1089 = vmatprep.subr.mxu0 0.0
    %1090 = vmatpush1.msra.mxu0 0.0
    %1091 = vmatprep.mubr.f32.mxu0 0.0
    %1092 = vmatmul.mubr.f32.gmra.mrb[0].mxu0 %v904
    %v1093 = vpop.f32.mrb[0].mxu0
    %v1094 = vadd.f32 0.0, %v1093
    %v1095 = vpop.f32.mrb[0].mxu0
    %1096 = vdwg.mxu0
    %1097 = vmatprep.subr.mxu0 0.0
    %1098 = vmatpush1.msra.mxu0 %v1007
    %1099 = vmatprep.subr.mxu0 0.0
    %1100 = vmatpush1.msra.mxu0 %v1008
    %1101 = vmatprep.subr.mxu0 0.0
    %1102 = vmatpush1.msra.mxu0 %v1009
    %1103 = vmatprep.subr.mxu0 0.0
    %1104 = vmatpush1.msra.mxu0 %v1010
    %1105 = vmatprep.subr.mxu0 0.0
    %1106 = vmatpush1.msra.mxu0 0.0
    %1107 = vmatprep.subr.mxu0 0.0
    %1108 = vmatpush1.msra.mxu0 0.0
    %1109 = vmatprep.subr.mxu0 0.0
    %1110 = vmatpush1.msra.mxu0 0.0
    %1111 = vmatprep.subr.mxu0 0.0
    %1112 = vmatpush1.msra.mxu0 0.0
    %1113 = vmatprep.subr.mxu0 0.0
    %1114 = vmatpush1.msra.mxu0 0.0
    %1115 = vmatprep.subr.mxu0 0.0
    %1116 = vmatpush1.msra.mxu0 0.0
    %1117 = vmatprep.subr.mxu0 0.0
    %1118 = vmatpush1.msra.mxu0 0.0
    %1119 = vmatprep.subr.mxu0 0.0
    %1120 = vmatpush1.msra.mxu0 0.0
    %1121 = vmatprep.subr.mxu0 0.0
    %1122 = vmatpush1.msra.mxu0 0.0
    %1123 = vmatprep.subr.mxu0 0.0
    %1124 = vmatpush1.msra.mxu0 0.0
    %1125 = vmatprep.subr.mxu0 0.0
    %1126 = vmatpush1.msra.mxu0 0.0
    %1127 = vmatprep.subr.mxu0 0.0
    %1128 = vmatpush1.msra.mxu0 0.0
    %1129 = vmatprep.subr.mxu0 0.0
    %1130 = vmatpush1.msra.mxu0 0.0
    %1131 = vmatprep.subr.mxu0 0.0
    %1132 = vmatpush1.msra.mxu0 0.0
    %1133 = vmatprep.subr.mxu0 0.0
    %1134 = vmatpush1.msra.mxu0 0.0
    %1135 = vmatprep.subr.mxu0 0.0
    %1136 = vmatpush1.msra.mxu0 0.0
    %1137 = vmatprep.subr.mxu0 0.0
    %1138 = vmatpush1.msra.mxu0 0.0
    %1139 = vmatprep.subr.mxu0 0.0
    %1140 = vmatpush1.msra.mxu0 0.0
    %1141 = vmatprep.subr.mxu0 0.0
    %1142 = vmatpush1.msra.mxu0 0.0
    %1143 = vmatprep.subr.mxu0 0.0
    %1144 = vmatpush1.msra.mxu0 0.0
    %1145 = vmatprep.subr.mxu0 0.0
    %1146 = vmatpush1.msra.mxu0 0.0
    %1147 = vmatprep.subr.mxu0 0.0
    %1148 = vmatpush1.msra.mxu0 0.0
    %1149 = vmatprep.subr.mxu0 0.0
    %1150 = vmatpush1.msra.mxu0 0.0
    %1151 = vmatprep.subr.mxu0 0.0
    %1152 = vmatpush1.msra.mxu0 0.0
    %1153 = vmatprep.subr.mxu0 0.0
    %1154 = vmatpush1.msra.mxu0 0.0
    %1155 = vmatprep.subr.mxu0 0.0
    %1156 = vmatpush1.msra.mxu0 0.0
    %1157 = vmatprep.subr.mxu0 0.0
    %1158 = vmatpush1.msra.mxu0 0.0
    %1159 = vmatprep.subr.mxu0 0.0
    %1160 = vmatpush1.msra.mxu0 0.0
    %1161 = vmatprep.mubr.f32.mxu0 0.0
    %1162 = vmatmul.mubr.f32.gmra.mrb[0].mxu0 %v491
    %v1163 = vpop.f32.mrb[0].mxu0
    %v1164 = vadd.f32 %v1094, %v1163
    %v1165 = vpop.f32.mrb[0].mxu0
    %1166 = vdwg.mxu0
    %v1167 = vlaneseq
    %v1168 = vshrl.u32 %v1167, 7
    %v1169 = vsub.s32 3, %v1168
    %v1170 = vrot.slane %v41, %v1169
    %v1171 = vadd.f32 %v1164, %v1170
    %v1172 = vtanh.pop %v1171
    %v1173 = vld [vmem:[#allocation2 + $0x1c0] sm:$0xff]
    %v1174 = vld [vmem:[#allocation2 + $0x1c8] sm:$0xff]
    %v1175 = vld [vmem:[#allocation2 + $0x1d0] sm:$0xff]
    %v1176 = vld [vmem:[#allocation2 + $0x1d8] sm:$0xff]
    %v1177 = vlaneseq
    %v1178 = vshrl.u32 %v1177, 7
    %v1179 = vsub.s32 4, %v1178
    %v1180 = vrot.slane %v41, %v1179
    %v1182 = vsel %vm72, %v1172, 0
    %1184 = vmatprep.subr.mxu0 0.0
    %1185 = vmatpush1.msra.mxu0 %v1173
    %1186 = vmatprep.subr.mxu0 0.0
    %1187 = vmatpush1.msra.mxu0 %v1174
    %1188 = vmatprep.subr.mxu0 0.0
    %1189 = vmatpush1.msra.mxu0 %v1175
    %1190 = vmatprep.subr.mxu0 0.0
    %1191 = vmatpush1.msra.mxu0 %v1176
    %1192 = vmatprep.subr.mxu0 0.0
    %1193 = vmatpush1.msra.mxu0 0.0
    %1194 = vmatprep.subr.mxu0 0.0
    %1195 = vmatpush1.msra.mxu0 0.0
    %1196 = vmatprep.subr.mxu0 0.0
    %1197 = vmatpush1.msra.mxu0 0.0
    %1198 = vmatprep.subr.mxu0 0.0
    %1199 = vmatpush1.msra.mxu0 0.0
    %1200 = vmatprep.subr.mxu0 0.0
    %1201 = vmatpush1.msra.mxu0 0.0
    %1202 = vmatprep.subr.mxu0 0.0
    %1203 = vmatpush1.msra.mxu0 0.0
    %1204 = vmatprep.subr.mxu0 0.0
    %1205 = vmatpush1.msra.mxu0 0.0
    %1206 = vmatprep.subr.mxu0 0.0
    %1207 = vmatpush1.msra.mxu0 0.0
    %1208 = vmatprep.subr.mxu0 0.0
    %1209 = vmatpush1.msra.mxu0 0.0
    %1210 = vmatprep.subr.mxu0 0.0
    %1211 = vmatpush1.msra.mxu0 0.0
    %1212 = vmatprep.subr.mxu0 0.0
    %1213 = vmatpush1.msra.mxu0 0.0
    %1214 = vmatprep.subr.mxu0 0.0
    %1215 = vmatpush1.msra.mxu0 0.0
    %1216 = vmatprep.subr.mxu0 0.0
    %1217 = vmatpush1.msra.mxu0 0.0
    %1218 = vmatprep.subr.mxu0 0.0
    %1219 = vmatpush1.msra.mxu0 0.0
    %1220 = vmatprep.subr.mxu0 0.0
    %1221 = vmatpush1.msra.mxu0 0.0
    %1222 = vmatprep.subr.mxu0 0.0
    %1223 = vmatpush1.msra.mxu0 0.0
    %1224 = vmatprep.subr.mxu0 0.0
    %1225 = vmatpush1.msra.mxu0 0.0
    %1226 = vmatprep.subr.mxu0 0.0
    %1227 = vmatpush1.msra.mxu0 0.0
    %1228 = vmatprep.subr.mxu0 0.0
    %1229 = vmatpush1.msra.mxu0 0.0
    %1230 = vmatprep.subr.mxu0 0.0
    %1231 = vmatpush1.msra.mxu0 0.0
    %1232 = vmatprep.subr.mxu0 0.0
    %1233 = vmatpush1.msra.mxu0 0.0
    %1234 = vmatprep.subr.mxu0 0.0
    %1235 = vmatpush1.msra.mxu0 0.0
    %1236 = vmatprep.subr.mxu0 0.0
    %1237 = vmatpush1.msra.mxu0 0.0
    %1238 = vmatprep.subr.mxu0 0.0
    %1239 = vmatpush1.msra.mxu0 0.0
    %1240 = vmatprep.subr.mxu0 0.0
    %1241 = vmatpush1.msra.mxu0 0.0
    %1242 = vmatprep.subr.mxu0 0.0
    %1243 = vmatpush1.msra.mxu0 0.0
    %1244 = vmatprep.subr.mxu0 0.0
    %1245 = vmatpush1.msra.mxu0 0.0
    %1246 = vmatprep.subr.mxu0 0.0
    %1247 = vmatpush1.msra.mxu0 0.0
    %1248 = vmatprep.mubr.f32.mxu0 0.0
    %1249 = vmatmul.mubr.f32.gmra.mrb[0].mxu0 %v1182
    %v1250 = vpop.f32.mrb[0].mxu0
    %v1251 = vadd.f32 %v1180, %v1250
    %v1252 = vpop.f32.mrb[0].mxu0
    %1253 = vdwg.mxu0
    %v1254 = vsel %vm571, %v1251, -inf
    %1255 = vmax.xlane.f32.xlu0 %v1254
    %v1256 = vpop.xlane.xlu0 %1255
    %v1257 = vsub.f32 %v1251, %v1256
    %v1258 = vmul.f32 %v1257, 1.442695
    %v1259 = vpow.pop %v1258
    %v1260 = vsel %vm571, %v1259, 0.0
    %1261 = vadd.xlane.f32.xlu0 %v1260
    %v1262 = vpop.xlane.xlu0 %1261
    %v1263 = vrcp.pop %v1262
    %v1264 = vmul.f32 %v1259, %v1263
    %1266 = vset.pattern.permute.xlu0 0
    %1267 = vperm.xlu0 %1266, %v1006
    %v1268 = vpop.permute.xlu0 %1267
    %v1270 = vmul.f32 %v1268, %v1264
    %v1271 = vsub.f32 1.0, %v1006
    %1273 = vset.pattern.permute.xlu0 0
    %1274 = vperm.xlu0 %1273, %v1271
    %v1275 = vpop.permute.xlu0 %1274
    %1279 = vset.pattern.permute.xlu0 0
    %1280 = vperm.xlu0 %1279, %v941
    %v1281 = vpop.permute.xlu0 %1280
    %1282 = vset.pattern.permute.xlu0 0
    %1283 = vperm.xlu0 %1282, %v943
    %v1284 = vpop.permute.xlu0 %1283
    %v1285 = vlaneseq
    %v1286 = vshrl.u32 %v1285, 7
    %v1287 = vsub.s32 %v712, %v1286
    %v1288 = vrot.slane %v1281, %v1287
    %v1289 = vlaneseq
    %v1290 = vshrl.u32 %v1289, 7
    %v1291 = vsub.s32 %v712, %v1290
    %v1292 = vrot.slane %v1284, %v1291
    %v1293 = vsel %vm729, %v1292, %v1288
    %v1295 = vmul.f32 %v1275, %v1293
    %v1296 = vld [vmem:[%s4] sm:$0x3]
    %v1297 = vadd.s32 %v712, 128
    %v1298 = vlaneseq
    %v1299 = vshrl.u32 %v1298, 7
    %v1300 = vsub.s32 0, %v1299
    %v1301 = vrot.slane %v1296, %v1300
    %1303 = vbcast.lane.b32.xlu0 %v1301, 256
    %v1304 = vpop.permute.xlu0 %1303
    %v1305 = vlaneseq
    %v1306 = vshrl.u32 %v1305, 7
    %v1307 = vsub.s32 1, %v1306
    %v1308 = vrot.slane %v1296, %v1307
    %1310 = vbcast.lane.b32.xlu0 %v1308, 256
    %v1311 = vpop.permute.xlu0 %1310
    %vm1312 = vcmp.eq.s32.totalorder %v1304, %v712
    %vm1313 = vcmp.eq.s32.totalorder %v1304, %v1297
    %vm1314 = vcmp.eq.s32.totalorder %v1311, %v712
    %vm1315 = vcmp.eq.s32.totalorder %v1311, %v1297
    %v1316 = vsel %vm1312, 1, 0
    %v1317 = vsel %vm1313, 1, 0
    %v1318 = vsel %vm1314, 1, 0
    %v1319 = vsel %vm1315, 1, 0
    %v1320 = vcvt.s32.f32 %v1316
    %v1321 = vcvt.s32.f32 %v1317
    %v1322 = vcvt.s32.f32 %v1318
    %v1323 = vcvt.s32.f32 %v1319
    %v1324 = vlaneseq
    %v1325 = vshrl.u32 %v1324, 7
    %v1326 = vsub.s32 0, %v1325
    %v1327 = vrot.slane %v1295, %v1326
    %1329 = vbcast.lane.b32.xlu0 %v1327, 256
    %v1330 = vpop.permute.xlu0 %1329
    %v1331 = vlaneseq
    %v1332 = vshrl.u32 %v1331, 7
    %v1333 = vsub.s32 1, %v1332
    %v1334 = vrot.slane %v1295, %v1333
    %1336 = vbcast.lane.b32.xlu0 %v1334, 256
    %v1337 = vpop.permute.xlu0 %1336
    %v1338 = vmul.f32 %v1330, %v1320
    %v1339 = vmul.f32 %v1330, %v1321
    %v1340 = vmul.f32 %v1337, %v1322
    %v1341 = vmul.f32 %v1337, %v1323
    %v1342 = vrot.slane %v1338, 4
    %v1343 = vadd.f32 %v1338, %v1342
    %v1344 = vrot.slane %v1343, 2
    %v1345 = vadd.f32 %v1343, %v1344
    %v1346 = vrot.slane %v1345, 1
    %v1347 = vadd.f32 %v1345, %v1346
    %v1348 = vrot.slane %v1339, 4
    %v1349 = vadd.f32 %v1339, %v1348
    %v1350 = vrot.slane %v1349, 2
    %v1351 = vadd.f32 %v1349, %v1350
    %v1352 = vrot.slane %v1351, 1
    %v1353 = vadd.f32 %v1351, %v1352
    %v1354 = vrot.slane %v1340, 4
    %v1355 = vadd.f32 %v1340, %v1354
    %v1356 = vrot.slane %v1355, 2
    %v1357 = vadd.f32 %v1355, %v1356
    %v1358 = vrot.slane %v1357, 1
    %v1359 = vadd.f32 %v1357, %v1358
    %v1360 = vrot.slane %v1341, 4
    %v1361 = vadd.f32 %v1341, %v1360
    %v1362 = vrot.slane %v1361, 2
    %v1363 = vadd.f32 %v1361, %v1362
    %v1364 = vrot.slane %v1363, 1
    %v1365 = vadd.f32 %v1363, %v1364
    %v1370 = vsel %vm729, %v1359, %v1347
    %v1371 = vsel %vm729, %v1365, %v1353
    %v1374 = vadd.f32 %v1270, %v1370
    %v1375 = vadd.f32 %v1371, 0.0
    %1378 = vrot.lane.b32.xlu0 %v904, 64
    %v1379 = vpop.permute.xlu0 %1378
    %v1381 = vadd.s32 %v712, 4294967232
    %v1382 = vlaneseq
    %v1383 = vshrl.u32 %v1382, 7
    %v1384 = vsub.s32 %v1381, %v1383
    %v1385 = vrot.slane %v1281, %v1384
    %v1386 = vlaneseq
    %v1387 = vshrl.u32 %v1386, 7
    %v1388 = vsub.s32 %v1381, %v1387
    %v1389 = vrot.slane %v1284, %v1388
    %v1390 = vsel %vm729, %v1389, %v1385
    %1392 = vrot.lane.b32.xlu0 %v1006, 72
    %v1393 = vpop.permute.xlu0 %1392
    %v1395 = vsel %vm72, %v490, %v398
    %v1396 = vsel %vm643, %v1395, %v1379
    %v1397 = vsel %vm643, %v1379, %v1390
    %vm1398 = vcmask 588800
    %v1399 = vsel %vm1398, %v1397, %v1393
    %vm1400 = vcmask 596992
    %v1401 = vsel %vm1400, %v1399, 0.0
    %v1406 = vcombine.low %v1374, %v1375
    %v1407 = vcombine.low %v1396, %v1401
    %v1409 = vunpack.c.l.s4 1983009808
    %v1410 = vunpack.c.0.s8 %v1409
    %v1411 = vlaneseq
    %v1412 = vshrl.u32 %v1411, 7
    %v1413 = vsub.s32 %v1410, %v1412
    %v1414 = vrot.slane %v1406, %v1413
    %v1416 = vunpack.c.l.s4 1983009808
    %v1417 = vunpack.c.0.s8 %v1416
    %v1418 = vlaneseq
    %v1419 = vshrl.u32 %v1418, 7
    %v1420 = vsub.s32 %v1417, %v1419
    %v1421 = vrot.slane %v1407, %v1420
    %v1422 = vcombine.low %v1414, %v1421
    %1424 = vst [vmem:[%s7] sm:$0xff] %v1422
    // Predicated region
    $region34: #{decoder_forward.1} parent=1 // pred_check
      _
    $region35: #{decoder_forward.1} parent=1 // pred_check_branch
      %1426 = sbr.rel (0) target = $region37
    $region36: #{decoder_forward.1} parent=1 // pred_region
      _
    $region37: #{decoder_forward.1} parent=1 // pred_fallthru
      _
    // Predicated region
    $region38: #{decoder_forward.1} parent=1 // pred_check
      _
    $region39: #{decoder_forward.1} parent=1 // pred_check_branch
      %1428 = sbr.rel (0) target = $region41
    $region40: #{decoder_forward.1} parent=1 // pred_region
      _
    $region41: #{decoder_forward.1} parent=1 // pred_fallthru
      _
    %1429 = vsyncpa [#allocation3], 1

</llo_original>
